<compile_context>
chip_gen: v5e
topology: v5e:2x2
jax: 0.10.0
libtpu: 0.0.40
codegen_flags: <defaults>
</compile_context>

<pallas_src>
import functools

import jax
import jax.numpy as jnp
from jax import lax
from jax.experimental import pallas as pl
from jax.experimental.pallas import tpu as pltpu

LANE = 128


def _dice_ce_kernel(logits_ref, tgt_ref, out_ref,
                    inter_acc, pred_acc, ground_acc, ce_acc,
                    *, n_ch, s_rows, grid_s, hw, masked):
    p = pl.program_id(1)
    s = pl.program_id(2)

    @pl.when(s == 0)
    def _():
        inter_acc[...] = jnp.zeros_like(inter_acc)
        pred_acc[...] = jnp.zeros_like(pred_acc)
        ground_acc[...] = jnp.zeros_like(ground_acc)
        ce_acc[...] = jnp.zeros_like(ce_acc)

    tgt = tgt_ref[0, 0].astype(jnp.int32)                    # (s_rows, 128)

    if masked:
        # Global pixel id of every element of this tile; pixels past the real
        # end of the image (ragged tail / clamped phantom blocks) are excluded
        # with selects so garbage HBM reads can never poison the sums.
        blk = p * grid_s + s
        row = lax.broadcasted_iota(jnp.int32, (s_rows, LANE), 0)
        lane = lax.broadcasted_iota(jnp.int32, (s_rows, LANE), 1)
        pix = (blk * s_rows + row) * LANE + lane
        valid = pix < hw
        tgt = jnp.where(valid, tgt, -1)

    def load(c):
        # Re-read from the resident VMEM tile (vld slots have slack) instead
        # of keeping a C-sized upcast list alive in VMEM / vregs.
        x = logits_ref[0, c].astype(jnp.float32)
        if masked:
            x = jnp.where(valid, x, 0.0)                     # kill NaN/inf garbage
        return x

    # Channel max (softmax stabilizer), unrolled over the static channel axis.
    m = load(0)
    for c in range(1, n_ch):
        m = jnp.maximum(m, load(c))

    # exp pass; also the target-logit term for CE.  Only `exps` stays live.
    exps = []
    xt = jnp.zeros_like(m)
    for c in range(n_ch):
        d = load(c) - m
        xt = xt + (tgt == c).astype(jnp.float32) * d
        exps.append(jnp.exp(d))
    ssum = exps[0]
    for c in range(1, n_ch):
        ssum = ssum + exps[c]
    inv_s = pl.reciprocal(ssum, approx=True)                 # one EUP recip / pixel
    log_s = jnp.log(ssum)

    # Fold full-tile per-pixel partials down to a single vreg with VPU adds so
    # accumulator read-modify-write touches ~1 vreg per quantity per step.
    if s_rows % 8 == 0:
        def fold(x):
            return jnp.sum(x.reshape(s_rows // 8, 8, LANE), axis=0)
    else:                                                    # tiny single-tile case
        def fold(x):
            return x

    for c in range(n_ch):
        onehot_c = (tgt == c).astype(jnp.float32)
        p_c = exps[c] * inv_s
        inter_acc[c] += fold(p_c * onehot_c)
        if masked:
            pred_acc[c] += fold(jnp.where(valid, p_c, 0.0))
        else:
            pred_acc[c] += fold(p_c)
        ground_acc[c] += fold(onehot_c)

    # Per-pixel CE: -log p[target] = log(sum exp) - (x[target] - max).
    if masked:
        ce_acc[...] += fold(jnp.where(valid, log_s - xt, 0.0))
    else:
        ce_acc[...] += fold(log_s - xt)

    @pl.when(s == pl.num_programs(2) - 1)
    def _():
        # Cross-lane reductions once per (n, p); emit raw partial sums
        # lane-dense: row0 = intersection[c], row1 = |pred|[c],
        # row2 = |ground|[c] (channel c stored in lane c), row3 lane0 = CE sum.
        lane_id = lax.broadcasted_iota(jnp.int32, (1, LANE), 1)
        i_row = jnp.zeros((1, LANE), jnp.float32)
        p_row = jnp.zeros((1, LANE), jnp.float32)
        g_row = jnp.zeros((1, LANE), jnp.float32)
        for c in range(n_ch):
            i_row = jnp.where(lane_id == c, jnp.sum(inter_acc[c], keepdims=True), i_row)
            p_row = jnp.where(lane_id == c, jnp.sum(pred_acc[c], keepdims=True), p_row)
            g_row = jnp.where(lane_id == c, jnp.sum(ground_acc[c], keepdims=True), g_row)
        ce_row = jnp.where(lane_id == 0, jnp.sum(ce_acc[...], keepdims=True), 0.0)
        out_ref[...] = jnp.concatenate([i_row, p_row, g_row, ce_row],
                                       axis=0).reshape(1, 1, 4, LANE)


def _vmem_limit_bytes():
    """Generation-aware scoped-VMEM budget (~3/4 of per-core capacity)."""
    cap = None
    try:
        info = pltpu.get_tpu_info()
        cap = getattr(info, "vmem_capacity_bytes", None)
    except Exception:
        cap = None
    if not cap:
        cap = 64 << 20                     # conservative per-core default (v7x)
    return int(min(cap * 3 // 4, 96 << 20))


def dice_ce_loss(y_true, y_pred, *, smooth_nr=1e-5, smooth_dr=1e-5):
    """Matches DiceCELossKeras.forward(y_true, y_pred) -> DiceCELoss(y_pred, y_true).

    y_pred: [N, C, H, W] float logits (NCHW), f32 or bf16 (streamed as-is).
    y_true: [N, 1, H, W] integer class indices.
    Returns scalar: DiceLoss(softmax, onehot, mean) + CrossEntropy(mean).
    """
    N, C, H, W = y_pred.shape
    HW = H * W

    rows = -(-HW // LANE)                                    # 128-pixel rows
    pad_hw = rows * LANE - HW
    tgt_dtype = jnp.int8 if C <= 127 else jnp.int32          # shrink target stream
    logits = y_pred.reshape(N, C, HW)
    tgt = y_true.reshape(N, 1, HW).astype(tgt_dtype)
    if pad_hw:
        # Only the <128-pixel lane remainder is padded (needed for the dense
        # (rows, 128) reshape); tile raggedness is masked in-kernel, so there
        # is no full-tensor HBM copy of the logits any more.
        logits = jnp.pad(logits, ((0, 0), (0, 0), (0, pad_hw)))
        tgt = jnp.pad(tgt, ((0, 0), (0, 0), (0, pad_hw)))
    logits = logits.reshape(N, C, rows, LANE)
    tgt = tgt.reshape(N, 1, rows, LANE)

    # --- generation-aware spatial tile sizing --------------------------------
    vmem_limit = _vmem_limit_bytes()
    in_isz = jnp.dtype(y_pred.dtype).itemsize
    tgt_isz = jnp.dtype(tgt_dtype).itemsize
    # Per-row bytes: double-buffered logits + target blocks plus f32 temporaries.
    per_row = LANE * (2 * C * in_isz + 2 * tgt_isz + (C + 8) * 4)
    s_rows_cap = (vmem_limit * 6 // 10) // per_row
    s_rows_cap = max(32, min(2048, (s_rows_cap // 32) * 32))  # multiple of 32

    s_rows = rows if rows <= s_rows_cap else s_rows_cap
    n_blocks = -(-rows // s_rows)
    # Split the spatial reduction across both v7x TensorCores when the batch
    # axis alone cannot keep them busy (no effect on single-core v5e/v6e).
    P = 2 if (N == 1 and n_blocks >= 2) else 1
    grid_s = -(-n_blocks // P)
    masked = (P * grid_s * s_rows * LANE) != HW
    acc_rows = 8 if s_rows % 8 == 0 else s_rows
    last_blk = n_blocks - 1

    kernel = functools.partial(_dice_ce_kernel, n_ch=C, s_rows=s_rows,
                               grid_s=grid_s, hw=HW, masked=masked)

    def spatial_blk(p_, s_):
        # Clamp phantom blocks (possible when P splits an odd block count);
        # their pixels are masked out inside the kernel.
        return jnp.minimum(p_ * grid_s + s_, last_blk)

    cost = pl.CostEstimate(
        flops=12 * N * C * rows * LANE,
        transcendentals=(C + 2) * N * rows * LANE,
        bytes_accessed=(logits.size * logits.dtype.itemsize
                        + tgt.size * tgt.dtype.itemsize
                        + N * P * 4 * LANE * 4),
    )

    out = pl.pallas_call(
        kernel,
        out_shape=jax.ShapeDtypeStruct((N, P, 4, LANE), jnp.float32),
        grid_spec=pltpu.PrefetchScalarGridSpec(
            num_scalar_prefetch=0,
            grid=(N, P, grid_s),
            in_specs=[
                pl.BlockSpec((1, C, s_rows, LANE),
                             lambda n, p, s: (n, 0, spatial_blk(p, s), 0)),
                pl.BlockSpec((1, 1, s_rows, LANE),
                             lambda n, p, s: (n, 0, spatial_blk(p, s), 0)),
            ],
            out_specs=pl.BlockSpec((1, 1, 4, LANE),
                                   lambda n, p, s: (n, p, 0, 0)),
            scratch_shapes=[
                pltpu.VMEM((C, acc_rows, LANE), jnp.float32),   # intersection
                pltpu.VMEM((C, acc_rows, LANE), jnp.float32),   # |pred|
                pltpu.VMEM((C, acc_rows, LANE), jnp.float32),   # |ground|
                pltpu.VMEM((acc_rows, LANE), jnp.float32),      # CE partial
            ],
        ),
        compiler_params=pltpu.CompilerParams(
            dimension_semantics=("parallel", "parallel", "arbitrary"),
            vmem_limit_bytes=vmem_limit),
        cost_estimate=cost,
    )(logits, tgt)

    # Tiny finalization in the wrapper (exact even with the spatial split P).
    inter = jnp.sum(out[:, :, 0, :C], axis=1)        # (N, C)
    pred_o = jnp.sum(out[:, :, 1, :C], axis=1)
    ground_o = jnp.sum(out[:, :, 2, :C], axis=1)
    ce_sum = jnp.sum(out[:, :, 3, 0])
    f = 1.0 - (2.0 * inter + smooth_nr) / (pred_o + ground_o + smooth_dr)
    # Dice: mean over (N, C); CE: mean over (N, H, W) real pixels.
    return jnp.mean(f) + ce_sum / float(N * HW)


def _reference(y_true, y_pred, smooth_nr=1e-5, smooth_dr=1e-5):
    """Pure-JAX reference of MONAI DiceCELoss(to_onehot_y=True, softmax=True)."""
    N, C, H, W = y_pred.shape
    logits = y_pred.astype(jnp.float32)
    tgt = y_true.astype(jnp.int32)[:, 0]                     # (N, H, W)
    onehot = jax.nn.one_hot(tgt, C, axis=1)                  # (N, C, H, W)
    p = jax.nn.softmax(logits, axis=1)
    inter = jnp.sum(p * onehot, axis=(2, 3))
    pred_o = jnp.sum(p, axis=(2, 3))
    ground_o = jnp.sum(onehot, axis=(2, 3))
    f = 1.0 - (2.0 * inter + smooth_nr) / (pred_o + ground_o + smooth_dr)
    dice = jnp.mean(f)
    logp = jax.nn.log_softmax(logits, axis=1)
    ce = -jnp.mean(jnp.sum(onehot * logp, axis=1))
    return dice + ce


if __name__ == "__main__":
    # DiceCELossKeras(to_onehot_y=True, softmax=True) has no learned parameters.
    N, C, H, W = 2, 4, 16, 16
    key = jax.random.PRNGKey(0)
    k_logits, k_tgt = jax.random.split(key)
    y_pred = jax.random.normal(k_logits, (N, C, H, W), dtype=jnp.float32)
    y_true = jax.random.randint(k_tgt, (N, 1, H, W), 0, C, dtype=jnp.int32)

    loss = jax.block_until_ready(dice_ce_loss(y_true, y_pred))
    ref = jax.block_until_ready(_reference(y_true, y_pred))

    assert jnp.isfinite(loss), "kernel produced non-finite loss"
    assert jnp.allclose(loss, ref, rtol=2e-3, atol=2e-3), (loss, ref)
    print("KERNEL_OK")
</pallas_src>

<mosaic_0001>
module attributes {stable_mosaic.version = 11 : i64} {
  func.func @_dice_ce_kernel(%arg0: i32, %arg1: i32, %arg2: i32, %arg3: memref<1x4x2x128xf32, #tpu.memory_space<vmem>>, %arg4: memref<1x1x2x128xi8, #tpu.memory_space<vmem>>, %arg5: memref<1x1x4x128xf32, #tpu.memory_space<vmem>>, %arg6: memref<4x2x128xf32, #tpu.memory_space<vmem>>, %arg7: memref<4x2x128xf32, #tpu.memory_space<vmem>>, %arg8: memref<4x2x128xf32, #tpu.memory_space<vmem>>, %arg9: memref<2x128xf32, #tpu.memory_space<vmem>>) attributes {dimension_semantics = [#tpu.dimension_semantics<parallel>, #tpu.dimension_semantics<parallel>, #tpu.dimension_semantics<arbitrary>], iteration_bounds = array<i64: 2, 1, 1>, scalar_prefetch = 0 : i64, scratch_operands = 4 : i64, tpu.core_type = #tpu.core_type<tc>, window_params = [{transform_indices = @transform_0, window_bounds = array<i64: 1, 4, 2, 128>}, {transform_indices = @transform_1, window_bounds = array<i64: 1, 1, 2, 128>}, {transform_indices = @transform_2, window_bounds = array<i64: 1, 1, 4, 128>}]} {
    %c0_i32 = arith.constant 0 : i32
    %0 = arith.cmpi eq, %arg2, %c0_i32 : i32
    %1 = arith.extui %0 : i1 to i32
    %c0_i32_0 = arith.constant 0 : i32
    %2 = arith.cmpi ne, %1, %c0_i32_0 : i32
    scf.if %2 {
      %cst_116 = arith.constant 0.000000e+00 : f32
      %166 = vector.broadcast %cst_116 : f32 to vector<4x2x128xf32>
      %c0_117 = arith.constant 0 : index
      %c0_118 = arith.constant 0 : index
      %c0_119 = arith.constant 0 : index
      %167 = vector.load %arg6[%c0_117, %c0_118, %c0_119] : memref<4x2x128xf32, #tpu.memory_space<vmem>>, vector<4x2x128xf32>
      tpu.vector_store %arg6[%c0_117, %c0_118, %c0_119], %166 {strides = array<i32>} : memref<4x2x128xf32, #tpu.memory_space<vmem>>, vector<4x2x128xf32>,
      %cst_120 = arith.constant 0.000000e+00 : f32
      %168 = vector.broadcast %cst_120 : f32 to vector<4x2x128xf32>
      %c0_121 = arith.constant 0 : index
      %c0_122 = arith.constant 0 : index
      %c0_123 = arith.constant 0 : index
      %169 = vector.load %arg7[%c0_121, %c0_122, %c0_123] : memref<4x2x128xf32, #tpu.memory_space<vmem>>, vector<4x2x128xf32>
      tpu.vector_store %arg7[%c0_121, %c0_122, %c0_123], %168 {strides = array<i32>} : memref<4x2x128xf32, #tpu.memory_space<vmem>>, vector<4x2x128xf32>,
      %cst_124 = arith.constant 0.000000e+00 : f32
      %170 = vector.broadcast %cst_124 : f32 to vector<4x2x128xf32>
      %c0_125 = arith.constant 0 : index
      %c0_126 = arith.constant 0 : index
      %c0_127 = arith.constant 0 : index
      %171 = vector.load %arg8[%c0_125, %c0_126, %c0_127] : memref<4x2x128xf32, #tpu.memory_space<vmem>>, vector<4x2x128xf32>
      tpu.vector_store %arg8[%c0_125, %c0_126, %c0_127], %170 {strides = array<i32>} : memref<4x2x128xf32, #tpu.memory_space<vmem>>, vector<4x2x128xf32>,
      %cst_128 = arith.constant 0.000000e+00 : f32
      %172 = vector.broadcast %cst_128 : f32 to vector<2x128xf32>
      %c0_129 = arith.constant 0 : index
      %c0_130 = arith.constant 0 : index
      %173 = vector.load %arg9[%c0_129, %c0_130] : memref<2x128xf32, #tpu.memory_space<vmem>>, vector<2x128xf32>
      tpu.vector_store %arg9[%c0_129, %c0_130], %172 {strides = array<i32>} : memref<2x128xf32, #tpu.memory_space<vmem>>, vector<2x128xf32>,
    } else {
    }
    %c0 = arith.constant 0 : index
    %c0_1 = arith.constant 0 : index
    %c0_2 = arith.constant 0 : index
    %c0_3 = arith.constant 0 : index
    %3 = vector.load %arg4[%c0, %c0_1, %c0_2, %c0_3] : memref<1x1x2x128xi8, #tpu.memory_space<vmem>>, vector<1x1x2x128xi8>
    %4 = vector.shape_cast %3 : vector<1x1x2x128xi8> to vector<2x128xi8>
    %5 = arith.extsi %4 : vector<2x128xi8> to vector<2x128xi32>
    %c0_4 = arith.constant 0 : index
    %c0_5 = arith.constant 0 : index
    %c0_6 = arith.constant 0 : index
    %c0_7 = arith.constant 0 : index
    %6 = vector.load %arg3[%c0_4, %c0_5, %c0_6, %c0_7] : memref<1x4x2x128xf32, #tpu.memory_space<vmem>>, vector<1x1x2x128xf32>
    %7 = vector.shape_cast %6 : vector<1x1x2x128xf32> to vector<2x128xf32>
    %c0_8 = arith.constant 0 : index
    %c1 = arith.constant 1 : index
    %c0_9 = arith.constant 0 : index
    %c0_10 = arith.constant 0 : index
    %8 = vector.load %arg3[%c0_8, %c1, %c0_9, %c0_10] : memref<1x4x2x128xf32, #tpu.memory_space<vmem>>, vector<1x1x2x128xf32>
    %9 = vector.shape_cast %8 : vector<1x1x2x128xf32> to vector<2x128xf32>
    %10 = arith.maximumf %7, %9 : vector<2x128xf32>
    %c0_11 = arith.constant 0 : index
    %c2 = arith.constant 2 : index
    %c0_12 = arith.constant 0 : index
    %c0_13 = arith.constant 0 : index
    %11 = vector.load %arg3[%c0_11, %c2, %c0_12, %c0_13] : memref<1x4x2x128xf32, #tpu.memory_space<vmem>>, vector<1x1x2x128xf32>
    %12 = vector.shape_cast %11 : vector<1x1x2x128xf32> to vector<2x128xf32>
    %13 = arith.maximumf %10, %12 : vector<2x128xf32>
    %c0_14 = arith.constant 0 : index
    %c3 = arith.constant 3 : index
    %c0_15 = arith.constant 0 : index
    %c0_16 = arith.constant 0 : index
    %14 = vector.load %arg3[%c0_14, %c3, %c0_15, %c0_16] : memref<1x4x2x128xf32, #tpu.memory_space<vmem>>, vector<1x1x2x128xf32>
    %15 = vector.shape_cast %14 : vector<1x1x2x128xf32> to vector<2x128xf32>
    %16 = arith.maximumf %13, %15 : vector<2x128xf32>
    %cst = arith.constant 0.000000e+00 : f32
    %17 = vector.broadcast %cst : f32 to vector<2x128xf32>
    %c0_17 = arith.constant 0 : index
    %c0_18 = arith.constant 0 : index
    %c0_19 = arith.constant 0 : index
    %c0_20 = arith.constant 0 : index
    %18 = vector.load %arg3[%c0_17, %c0_18, %c0_19, %c0_20] : memref<1x4x2x128xf32, #tpu.memory_space<vmem>>, vector<1x1x2x128xf32>
    %19 = vector.shape_cast %18 : vector<1x1x2x128xf32> to vector<2x128xf32>
    %20 = arith.subf %19, %16 : vector<2x128xf32>
    %c0_i32_21 = arith.constant 0 : i32
    %21 = vector.broadcast %c0_i32_21 : i32 to vector<2x128xi32>
    %22 = arith.cmpi eq, %5, %21 : vector<2x128xi32>
    %23 = arith.extui %22 : vector<2x128xi1> to vector<2x128xi32>
    %24 = arith.sitofp %23 : vector<2x128xi32> to vector<2x128xf32>
    %25 = arith.mulf %24, %20 : vector<2x128xf32>
    %26 = arith.addf %17, %25 : vector<2x128xf32>
    %27 = math.exp %20 : vector<2x128xf32>
    %c0_22 = arith.constant 0 : index
    %c1_23 = arith.constant 1 : index
    %c0_24 = arith.constant 0 : index
    %c0_25 = arith.constant 0 : index
    %28 = vector.load %arg3[%c0_22, %c1_23, %c0_24, %c0_25] : memref<1x4x2x128xf32, #tpu.memory_space<vmem>>, vector<1x1x2x128xf32>
    %29 = vector.shape_cast %28 : vector<1x1x2x128xf32> to vector<2x128xf32>
    %30 = arith.subf %29, %16 : vector<2x128xf32>
    %c1_i32 = arith.constant 1 : i32
    %31 = vector.broadcast %c1_i32 : i32 to vector<2x128xi32>
    %32 = arith.cmpi eq, %5, %31 : vector<2x128xi32>
    %33 = arith.extui %32 : vector<2x128xi1> to vector<2x128xi32>
    %34 = arith.sitofp %33 : vector<2x128xi32> to vector<2x128xf32>
    %35 = arith.mulf %34, %30 : vector<2x128xf32>
    %36 = arith.addf %26, %35 : vector<2x128xf32>
    %37 = math.exp %30 : vector<2x128xf32>
    %c0_26 = arith.constant 0 : index
    %c2_27 = arith.constant 2 : index
    %c0_28 = arith.constant 0 : index
    %c0_29 = arith.constant 0 : index
    %38 = vector.load %arg3[%c0_26, %c2_27, %c0_28, %c0_29] : memref<1x4x2x128xf32, #tpu.memory_space<vmem>>, vector<1x1x2x128xf32>
    %39 = vector.shape_cast %38 : vector<1x1x2x128xf32> to vector<2x128xf32>
    %40 = arith.subf %39, %16 : vector<2x128xf32>
    %c2_i32 = arith.constant 2 : i32
    %41 = vector.broadcast %c2_i32 : i32 to vector<2x128xi32>
    %42 = arith.cmpi eq, %5, %41 : vector<2x128xi32>
    %43 = arith.extui %42 : vector<2x128xi1> to vector<2x128xi32>
    %44 = arith.sitofp %43 : vector<2x128xi32> to vector<2x128xf32>
    %45 = arith.mulf %44, %40 : vector<2x128xf32>
    %46 = arith.addf %36, %45 : vector<2x128xf32>
    %47 = math.exp %40 : vector<2x128xf32>
    %c0_30 = arith.constant 0 : index
    %c3_31 = arith.constant 3 : index
    %c0_32 = arith.constant 0 : index
    %c0_33 = arith.constant 0 : index
    %48 = vector.load %arg3[%c0_30, %c3_31, %c0_32, %c0_33] : memref<1x4x2x128xf32, #tpu.memory_space<vmem>>, vector<1x1x2x128xf32>
    %49 = vector.shape_cast %48 : vector<1x1x2x128xf32> to vector<2x128xf32>
    %50 = arith.subf %49, %16 : vector<2x128xf32>
    %c3_i32 = arith.constant 3 : i32
    %51 = vector.broadcast %c3_i32 : i32 to vector<2x128xi32>
    %52 = arith.cmpi eq, %5, %51 : vector<2x128xi32>
    %53 = arith.extui %52 : vector<2x128xi1> to vector<2x128xi32>
    %54 = arith.sitofp %53 : vector<2x128xi32> to vector<2x128xf32>
    %55 = arith.mulf %54, %50 : vector<2x128xf32>
    %56 = arith.addf %46, %55 : vector<2x128xf32>
    %57 = math.exp %50 : vector<2x128xf32>
    %58 = arith.addf %27, %37 : vector<2x128xf32>
    %59 = arith.addf %58, %47 : vector<2x128xf32>
    %60 = arith.addf %59, %57 : vector<2x128xf32>
    %61 = tpu.reciprocal %60 {approx = true} : vector<2x128xf32> -> vector<2x128xf32>
    %62 = math.log %60 : vector<2x128xf32>
    %c0_i32_34 = arith.constant 0 : i32
    %63 = vector.broadcast %c0_i32_34 : i32 to vector<2x128xi32>
    %64 = arith.cmpi eq, %5, %63 : vector<2x128xi32>
    %65 = arith.extui %64 : vector<2x128xi1> to vector<2x128xi32>
    %66 = arith.sitofp %65 : vector<2x128xi32> to vector<2x128xf32>
    %67 = arith.mulf %27, %61 : vector<2x128xf32>
    %c0_35 = arith.constant 0 : index
    %c0_36 = arith.constant 0 : index
    %c0_37 = arith.constant 0 : index
    %68 = vector.load %arg6[%c0_35, %c0_36, %c0_37] : memref<4x2x128xf32, #tpu.memory_space<vmem>>, vector<1x2x128xf32>
    %69 = vector.shape_cast %68 : vector<1x2x128xf32> to vector<2x128xf32>
    %70 = arith.mulf %67, %66 : vector<2x128xf32>
    %71 = arith.addf %69, %70 : vector<2x128xf32>
    %c0_38 = arith.constant 0 : index
    %c0_39 = arith.constant 0 : index
    %c0_40 = arith.constant 0 : index
    %72 = vector.load %arg6[%c0_38, %c0_39, %c0_40] : memref<4x2x128xf32, #tpu.memory_space<vmem>>, vector<1x2x128xf32>
    %73 = vector.shape_cast %72 : vector<1x2x128xf32> to vector<2x128xf32>
    %74 = vector.shape_cast %71 : vector<2x128xf32> to vector<1x2x128xf32>
    tpu.vector_store %arg6[%c0_38, %c0_39, %c0_40], %74 {strides = array<i32>} : memref<4x2x128xf32, #tpu.memory_space<vmem>>, vector<1x2x128xf32>,
    %c0_41 = arith.constant 0 : index
    %c0_42 = arith.constant 0 : index
    %c0_43 = arith.constant 0 : index
    %75 = vector.load %arg7[%c0_41, %c0_42, %c0_43] : memref<4x2x128xf32, #tpu.memory_space<vmem>>, vector<1x2x128xf32>
    %76 = vector.shape_cast %75 : vector<1x2x128xf32> to vector<2x128xf32>
    %77 = arith.addf %76, %67 : vector<2x128xf32>
    %c0_44 = arith.constant 0 : index
    %c0_45 = arith.constant 0 : index
    %c0_46 = arith.constant 0 : index
    %78 = vector.load %arg7[%c0_44, %c0_45, %c0_46] : memref<4x2x128xf32, #tpu.memory_space<vmem>>, vector<1x2x128xf32>
    %79 = vector.shape_cast %78 : vector<1x2x128xf32> to vector<2x128xf32>
    %80 = vector.shape_cast %77 : vector<2x128xf32> to vector<1x2x128xf32>
    tpu.vector_store %arg7[%c0_44, %c0_45, %c0_46], %80 {strides = array<i32>} : memref<4x2x128xf32, #tpu.memory_space<vmem>>, vector<1x2x128xf32>,
    %c0_47 = arith.constant 0 : index
    %c0_48 = arith.constant 0 : index
    %c0_49 = arith.constant 0 : index
    %81 = vector.load %arg8[%c0_47, %c0_48, %c0_49] : memref<4x2x128xf32, #tpu.memory_space<vmem>>, vector<1x2x128xf32>
    %82 = vector.shape_cast %81 : vector<1x2x128xf32> to vector<2x128xf32>
    %83 = arith.addf %82, %66 : vector<2x128xf32>
    %c0_50 = arith.constant 0 : index
    %c0_51 = arith.constant 0 : index
    %c0_52 = arith.constant 0 : index
    %84 = vector.load %arg8[%c0_50, %c0_51, %c0_52] : memref<4x2x128xf32, #tpu.memory_space<vmem>>, vector<1x2x128xf32>
    %85 = vector.shape_cast %84 : vector<1x2x128xf32> to vector<2x128xf32>
    %86 = vector.shape_cast %83 : vector<2x128xf32> to vector<1x2x128xf32>
    tpu.vector_store %arg8[%c0_50, %c0_51, %c0_52], %86 {strides = array<i32>} : memref<4x2x128xf32, #tpu.memory_space<vmem>>, vector<1x2x128xf32>,
    %c1_i32_53 = arith.constant 1 : i32
    %87 = vector.broadcast %c1_i32_53 : i32 to vector<2x128xi32>
    %88 = arith.cmpi eq, %5, %87 : vector<2x128xi32>
    %89 = arith.extui %88 : vector<2x128xi1> to vector<2x128xi32>
    %90 = arith.sitofp %89 : vector<2x128xi32> to vector<2x128xf32>
    %91 = arith.mulf %37, %61 : vector<2x128xf32>
    %c1_54 = arith.constant 1 : index
    %c0_55 = arith.constant 0 : index
    %c0_56 = arith.constant 0 : index
    %92 = vector.load %arg6[%c1_54, %c0_55, %c0_56] : memref<4x2x128xf32, #tpu.memory_space<vmem>>, vector<1x2x128xf32>
    %93 = vector.shape_cast %92 : vector<1x2x128xf32> to vector<2x128xf32>
    %94 = arith.mulf %91, %90 : vector<2x128xf32>
    %95 = arith.addf %93, %94 : vector<2x128xf32>
    %c1_57 = arith.constant 1 : index
    %c0_58 = arith.constant 0 : index
    %c0_59 = arith.constant 0 : index
    %96 = vector.load %arg6[%c1_57, %c0_58, %c0_59] : memref<4x2x128xf32, #tpu.memory_space<vmem>>, vector<1x2x128xf32>
    %97 = vector.shape_cast %96 : vector<1x2x128xf32> to vector<2x128xf32>
    %98 = vector.shape_cast %95 : vector<2x128xf32> to vector<1x2x128xf32>
    tpu.vector_store %arg6[%c1_57, %c0_58, %c0_59], %98 {strides = array<i32>} : memref<4x2x128xf32, #tpu.memory_space<vmem>>, vector<1x2x128xf32>,
    %c1_60 = arith.constant 1 : index
    %c0_61 = arith.constant 0 : index
    %c0_62 = arith.constant 0 : index
    %99 = vector.load %arg7[%c1_60, %c0_61, %c0_62] : memref<4x2x128xf32, #tpu.memory_space<vmem>>, vector<1x2x128xf32>
    %100 = vector.shape_cast %99 : vector<1x2x128xf32> to vector<2x128xf32>
    %101 = arith.addf %100, %91 : vector<2x128xf32>
    %c1_63 = arith.constant 1 : index
    %c0_64 = arith.constant 0 : index
    %c0_65 = arith.constant 0 : index
    %102 = vector.load %arg7[%c1_63, %c0_64, %c0_65] : memref<4x2x128xf32, #tpu.memory_space<vmem>>, vector<1x2x128xf32>
    %103 = vector.shape_cast %102 : vector<1x2x128xf32> to vector<2x128xf32>
    %104 = vector.shape_cast %101 : vector<2x128xf32> to vector<1x2x128xf32>
    tpu.vector_store %arg7[%c1_63, %c0_64, %c0_65], %104 {strides = array<i32>} : memref<4x2x128xf32, #tpu.memory_space<vmem>>, vector<1x2x128xf32>,
    %c1_66 = arith.constant 1 : index
    %c0_67 = arith.constant 0 : index
    %c0_68 = arith.constant 0 : index
    %105 = vector.load %arg8[%c1_66, %c0_67, %c0_68] : memref<4x2x128xf32, #tpu.memory_space<vmem>>, vector<1x2x128xf32>
    %106 = vector.shape_cast %105 : vector<1x2x128xf32> to vector<2x128xf32>
    %107 = arith.addf %106, %90 : vector<2x128xf32>
    %c1_69 = arith.constant 1 : index
    %c0_70 = arith.constant 0 : index
    %c0_71 = arith.constant 0 : index
    %108 = vector.load %arg8[%c1_69, %c0_70, %c0_71] : memref<4x2x128xf32, #tpu.memory_space<vmem>>, vector<1x2x128xf32>
    %109 = vector.shape_cast %108 : vector<1x2x128xf32> to vector<2x128xf32>
    %110 = vector.shape_cast %107 : vector<2x128xf32> to vector<1x2x128xf32>
    tpu.vector_store %arg8[%c1_69, %c0_70, %c0_71], %110 {strides = array<i32>} : memref<4x2x128xf32, #tpu.memory_space<vmem>>, vector<1x2x128xf32>,
    %c2_i32_72 = arith.constant 2 : i32
    %111 = vector.broadcast %c2_i32_72 : i32 to vector<2x128xi32>
    %112 = arith.cmpi eq, %5, %111 : vector<2x128xi32>
    %113 = arith.extui %112 : vector<2x128xi1> to vector<2x128xi32>
    %114 = arith.sitofp %113 : vector<2x128xi32> to vector<2x128xf32>
    %115 = arith.mulf %47, %61 : vector<2x128xf32>
    %c2_73 = arith.constant 2 : index
    %c0_74 = arith.constant 0 : index
    %c0_75 = arith.constant 0 : index
    %116 = vector.load %arg6[%c2_73, %c0_74, %c0_75] : memref<4x2x128xf32, #tpu.memory_space<vmem>>, vector<1x2x128xf32>
    %117 = vector.shape_cast %116 : vector<1x2x128xf32> to vector<2x128xf32>
    %118 = arith.mulf %115, %114 : vector<2x128xf32>
    %119 = arith.addf %117, %118 : vector<2x128xf32>
    %c2_76 = arith.constant 2 : index
    %c0_77 = arith.constant 0 : index
    %c0_78 = arith.constant 0 : index
    %120 = vector.load %arg6[%c2_76, %c0_77, %c0_78] : memref<4x2x128xf32, #tpu.memory_space<vmem>>, vector<1x2x128xf32>
    %121 = vector.shape_cast %120 : vector<1x2x128xf32> to vector<2x128xf32>
    %122 = vector.shape_cast %119 : vector<2x128xf32> to vector<1x2x128xf32>
    tpu.vector_store %arg6[%c2_76, %c0_77, %c0_78], %122 {strides = array<i32>} : memref<4x2x128xf32, #tpu.memory_space<vmem>>, vector<1x2x128xf32>,
    %c2_79 = arith.constant 2 : index
    %c0_80 = arith.constant 0 : index
    %c0_81 = arith.constant 0 : index
    %123 = vector.load %arg7[%c2_79, %c0_80, %c0_81] : memref<4x2x128xf32, #tpu.memory_space<vmem>>, vector<1x2x128xf32>
    %124 = vector.shape_cast %123 : vector<1x2x128xf32> to vector<2x128xf32>
    %125 = arith.addf %124, %115 : vector<2x128xf32>
    %c2_82 = arith.constant 2 : index
    %c0_83 = arith.constant 0 : index
    %c0_84 = arith.constant 0 : index
    %126 = vector.load %arg7[%c2_82, %c0_83, %c0_84] : memref<4x2x128xf32, #tpu.memory_space<vmem>>, vector<1x2x128xf32>
    %127 = vector.shape_cast %126 : vector<1x2x128xf32> to vector<2x128xf32>
    %128 = vector.shape_cast %125 : vector<2x128xf32> to vector<1x2x128xf32>
    tpu.vector_store %arg7[%c2_82, %c0_83, %c0_84], %128 {strides = array<i32>} : memref<4x2x128xf32, #tpu.memory_space<vmem>>, vector<1x2x128xf32>,
    %c2_85 = arith.constant 2 : index
    %c0_86 = arith.constant 0 : index
    %c0_87 = arith.constant 0 : index
    %129 = vector.load %arg8[%c2_85, %c0_86, %c0_87] : memref<4x2x128xf32, #tpu.memory_space<vmem>>, vector<1x2x128xf32>
    %130 = vector.shape_cast %129 : vector<1x2x128xf32> to vector<2x128xf32>
    %131 = arith.addf %130, %114 : vector<2x128xf32>
    %c2_88 = arith.constant 2 : index
    %c0_89 = arith.constant 0 : index
    %c0_90 = arith.constant 0 : index
    %132 = vector.load %arg8[%c2_88, %c0_89, %c0_90] : memref<4x2x128xf32, #tpu.memory_space<vmem>>, vector<1x2x128xf32>
    %133 = vector.shape_cast %132 : vector<1x2x128xf32> to vector<2x128xf32>
    %134 = vector.shape_cast %131 : vector<2x128xf32> to vector<1x2x128xf32>
    tpu.vector_store %arg8[%c2_88, %c0_89, %c0_90], %134 {strides = array<i32>} : memref<4x2x128xf32, #tpu.memory_space<vmem>>, vector<1x2x128xf32>,
    %c3_i32_91 = arith.constant 3 : i32
    %135 = vector.broadcast %c3_i32_91 : i32 to vector<2x128xi32>
    %136 = arith.cmpi eq, %5, %135 : vector<2x128xi32>
    %137 = arith.extui %136 : vector<2x128xi1> to vector<2x128xi32>
    %138 = arith.sitofp %137 : vector<2x128xi32> to vector<2x128xf32>
    %139 = arith.mulf %57, %61 : vector<2x128xf32>
    %c3_92 = arith.constant 3 : index
    %c0_93 = arith.constant 0 : index
    %c0_94 = arith.constant 0 : index
    %140 = vector.load %arg6[%c3_92, %c0_93, %c0_94] : memref<4x2x128xf32, #tpu.memory_space<vmem>>, vector<1x2x128xf32>
    %141 = vector.shape_cast %140 : vector<1x2x128xf32> to vector<2x128xf32>
    %142 = arith.mulf %139, %138 : vector<2x128xf32>
    %143 = arith.addf %141, %142 : vector<2x128xf32>
    %c3_95 = arith.constant 3 : index
    %c0_96 = arith.constant 0 : index
    %c0_97 = arith.constant 0 : index
    %144 = vector.load %arg6[%c3_95, %c0_96, %c0_97] : memref<4x2x128xf32, #tpu.memory_space<vmem>>, vector<1x2x128xf32>
    %145 = vector.shape_cast %144 : vector<1x2x128xf32> to vector<2x128xf32>
    %146 = vector.shape_cast %143 : vector<2x128xf32> to vector<1x2x128xf32>
    tpu.vector_store %arg6[%c3_95, %c0_96, %c0_97], %146 {strides = array<i32>} : memref<4x2x128xf32, #tpu.memory_space<vmem>>, vector<1x2x128xf32>,
    %c3_98 = arith.constant 3 : index
    %c0_99 = arith.constant 0 : index
    %c0_100 = arith.constant 0 : index
    %147 = vector.load %arg7[%c3_98, %c0_99, %c0_100] : memref<4x2x128xf32, #tpu.memory_space<vmem>>, vector<1x2x128xf32>
    %148 = vector.shape_cast %147 : vector<1x2x128xf32> to vector<2x128xf32>
    %149 = arith.addf %148, %139 : vector<2x128xf32>
    %c3_101 = arith.constant 3 : index
    %c0_102 = arith.constant 0 : index
    %c0_103 = arith.constant 0 : index
    %150 = vector.load %arg7[%c3_101, %c0_102, %c0_103] : memref<4x2x128xf32, #tpu.memory_space<vmem>>, vector<1x2x128xf32>
    %151 = vector.shape_cast %150 : vector<1x2x128xf32> to vector<2x128xf32>
    %152 = vector.shape_cast %149 : vector<2x128xf32> to vector<1x2x128xf32>
    tpu.vector_store %arg7[%c3_101, %c0_102, %c0_103], %152 {strides = array<i32>} : memref<4x2x128xf32, #tpu.memory_space<vmem>>, vector<1x2x128xf32>,
    %c3_104 = arith.constant 3 : index
    %c0_105 = arith.constant 0 : index
    %c0_106 = arith.constant 0 : index
    %153 = vector.load %arg8[%c3_104, %c0_105, %c0_106] : memref<4x2x128xf32, #tpu.memory_space<vmem>>, vector<1x2x128xf32>
    %154 = vector.shape_cast %153 : vector<1x2x128xf32> to vector<2x128xf32>
    %155 = arith.addf %154, %138 : vector<2x128xf32>
    %c3_107 = arith.constant 3 : index
    %c0_108 = arith.constant 0 : index
    %c0_109 = arith.constant 0 : index
    %156 = vector.load %arg8[%c3_107, %c0_108, %c0_109] : memref<4x2x128xf32, #tpu.memory_space<vmem>>, vector<1x2x128xf32>
    %157 = vector.shape_cast %156 : vector<1x2x128xf32> to vector<2x128xf32>
    %158 = vector.shape_cast %155 : vector<2x128xf32> to vector<1x2x128xf32>
    tpu.vector_store %arg8[%c3_107, %c0_108, %c0_109], %158 {strides = array<i32>} : memref<4x2x128xf32, #tpu.memory_space<vmem>>, vector<1x2x128xf32>,
    %c0_110 = arith.constant 0 : index
    %c0_111 = arith.constant 0 : index
    %159 = vector.load %arg9[%c0_110, %c0_111] : memref<2x128xf32, #tpu.memory_space<vmem>>, vector<2x128xf32>
    %160 = arith.subf %62, %56 : vector<2x128xf32>
    %161 = arith.addf %159, %160 : vector<2x128xf32>
    %c0_112 = arith.constant 0 : index
    %c0_113 = arith.constant 0 : index
    %162 = vector.load %arg9[%c0_112, %c0_113] : memref<2x128xf32, #tpu.memory_space<vmem>>, vector<2x128xf32>
    tpu.vector_store %arg9[%c0_112, %c0_113], %161 {strides = array<i32>} : memref<2x128xf32, #tpu.memory_space<vmem>>, vector<2x128xf32>,
    %c0_i32_114 = arith.constant 0 : i32
    %163 = arith.cmpi eq, %arg2, %c0_i32_114 : i32
    %164 = arith.extui %163 : i1 to i32
    %c0_i32_115 = arith.constant 0 : i32
    %165 = arith.cmpi ne, %164, %c0_i32_115 : i32
    scf.if %165 {
      %166 = tpu.iota {dimensions = array<i32: 1>} : vector<1x128xi32>
      %cst_116 = arith.constant 0.000000e+00 : f32
      %167 = vector.broadcast %cst_116 : f32 to vector<1x128xf32>
      %cst_117 = arith.constant 0.000000e+00 : f32
      %168 = vector.broadcast %cst_117 : f32 to vector<1x128xf32>
      %cst_118 = arith.constant 0.000000e+00 : f32
      %169 = vector.broadcast %cst_118 : f32 to vector<1x128xf32>
      %c0_i32_119 = arith.constant 0 : i32
      %170 = vector.broadcast %c0_i32_119 : i32 to vector<1x128xi32>
      %171 = arith.cmpi eq, %166, %170 : vector<1x128xi32>
      %c0_120 = arith.constant 0 : index
      %c0_121 = arith.constant 0 : index
      %c0_122 = arith.constant 0 : index
      %172 = vector.load %arg6[%c0_120, %c0_121, %c0_122] : memref<4x2x128xf32, #tpu.memory_space<vmem>>, vector<1x2x128xf32>
      %173 = vector.shape_cast %172 : vector<1x2x128xf32> to vector<2x128xf32>
      %174 = vector.shape_cast %173 : vector<2x128xf32> to vector<1x2x128xf32>
      %cst_123 = arith.constant dense<0.000000e+00> : vector<1xf32>
      %175 = vector.multi_reduction <add>, %174, %cst_123 [1, 2] : vector<1x2x128xf32> to vector<1xf32>
      %176 = vector.shape_cast %175 : vector<1xf32> to vector<1x1x1xf32>
      %177 = vector.extract %176[0, 0, 0] : f32 from vector<1x1x1xf32>
      %178 = vector.broadcast %177 : f32 to vector<1x1xf32>
      %179 = vector.shape_cast %178 : vector<1x1xf32> to vector<1x1xf32>
      %180 = vector.broadcast %179 : vector<1x1xf32> to vector<1x128xf32>
      %181 = arith.select %171, %180, %167 : vector<1x128xi1>, vector<1x128xf32>
      %c0_i32_124 = arith.constant 0 : i32
      %182 = vector.broadcast %c0_i32_124 : i32 to vector<1x128xi32>
      %183 = arith.cmpi eq, %166, %182 : vector<1x128xi32>
      %c0_125 = arith.constant 0 : index
      %c0_126 = arith.constant 0 : index
      %c0_127 = arith.constant 0 : index
      %184 = vector.load %arg7[%c0_125, %c0_126, %c0_127] : memref<4x2x128xf32, #tpu.memory_space<vmem>>, vector<1x2x128xf32>
      %185 = vector.shape_cast %184 : vector<1x2x128xf32> to vector<2x128xf32>
      %186 = vector.shape_cast %185 : vector<2x128xf32> to vector<1x2x128xf32>
      %cst_128 = arith.constant dense<0.000000e+00> : vector<1xf32>
      %187 = vector.multi_reduction <add>, %186, %cst_128 [1, 2] : vector<1x2x128xf32> to vector<1xf32>
      %188 = vector.shape_cast %187 : vector<1xf32> to vector<1x1x1xf32>
      %189 = vector.extract %188[0, 0, 0] : f32 from vector<1x1x1xf32>
      %190 = vector.broadcast %189 : f32 to vector<1x1xf32>
      %191 = vector.shape_cast %190 : vector<1x1xf32> to vector<1x1xf32>
      %192 = vector.broadcast %191 : vector<1x1xf32> to vector<1x128xf32>
      %193 = arith.select %183, %192, %168 : vector<1x128xi1>, vector<1x128xf32>
      %c0_i32_129 = arith.constant 0 : i32
      %194 = vector.broadcast %c0_i32_129 : i32 to vector<1x128xi32>
      %195 = arith.cmpi eq, %166, %194 : vector<1x128xi32>
      %c0_130 = arith.constant 0 : index
      %c0_131 = arith.constant 0 : index
      %c0_132 = arith.constant 0 : index
      %196 = vector.load %arg8[%c0_130, %c0_131, %c0_132] : memref<4x2x128xf32, #tpu.memory_space<vmem>>, vector<1x2x128xf32>
      %197 = vector.shape_cast %196 : vector<1x2x128xf32> to vector<2x128xf32>
      %198 = vector.shape_cast %197 : vector<2x128xf32> to vector<1x2x128xf32>
      %cst_133 = arith.constant dense<0.000000e+00> : vector<1xf32>
      %199 = vector.multi_reduction <add>, %198, %cst_133 [1, 2] : vector<1x2x128xf32> to vector<1xf32>
      %200 = vector.shape_cast %199 : vector<1xf32> to vector<1x1x1xf32>
      %201 = vector.extract %200[0, 0, 0] : f32 from vector<1x1x1xf32>
      %202 = vector.broadcast %201 : f32 to vector<1x1xf32>
      %203 = vector.shape_cast %202 : vector<1x1xf32> to vector<1x1xf32>
      %204 = vector.broadcast %203 : vector<1x1xf32> to vector<1x128xf32>
      %205 = arith.select %195, %204, %169 : vector<1x128xi1>, vector<1x128xf32>
      %c1_i32_134 = arith.constant 1 : i32
      %206 = vector.broadcast %c1_i32_134 : i32 to vector<1x128xi32>
      %207 = arith.cmpi eq, %166, %206 : vector<1x128xi32>
      %c1_135 = arith.constant 1 : index
      %c0_136 = arith.constant 0 : index
      %c0_137 = arith.constant 0 : index
      %208 = vector.load %arg6[%c1_135, %c0_136, %c0_137] : memref<4x2x128xf32, #tpu.memory_space<vmem>>, vector<1x2x128xf32>
      %209 = vector.shape_cast %208 : vector<1x2x128xf32> to vector<2x128xf32>
      %210 = vector.shape_cast %209 : vector<2x128xf32> to vector<1x2x128xf32>
      %cst_138 = arith.constant dense<0.000000e+00> : vector<1xf32>
      %211 = vector.multi_reduction <add>, %210, %cst_138 [1, 2] : vector<1x2x128xf32> to vector<1xf32>
      %212 = vector.shape_cast %211 : vector<1xf32> to vector<1x1x1xf32>
      %213 = vector.extract %212[0, 0, 0] : f32 from vector<1x1x1xf32>
      %214 = vector.broadcast %213 : f32 to vector<1x1xf32>
      %215 = vector.shape_cast %214 : vector<1x1xf32> to vector<1x1xf32>
      %216 = vector.broadcast %215 : vector<1x1xf32> to vector<1x128xf32>
      %217 = arith.select %207, %216, %181 : vector<1x128xi1>, vector<1x128xf32>
      %c1_i32_139 = arith.constant 1 : i32
      %218 = vector.broadcast %c1_i32_139 : i32 to vector<1x128xi32>
      %219 = arith.cmpi eq, %166, %218 : vector<1x128xi32>
      %c1_140 = arith.constant 1 : index
      %c0_141 = arith.constant 0 : index
      %c0_142 = arith.constant 0 : index
      %220 = vector.load %arg7[%c1_140, %c0_141, %c0_142] : memref<4x2x128xf32, #tpu.memory_space<vmem>>, vector<1x2x128xf32>
      %221 = vector.shape_cast %220 : vector<1x2x128xf32> to vector<2x128xf32>
      %222 = vector.shape_cast %221 : vector<2x128xf32> to vector<1x2x128xf32>
      %cst_143 = arith.constant dense<0.000000e+00> : vector<1xf32>
      %223 = vector.multi_reduction <add>, %222, %cst_143 [1, 2] : vector<1x2x128xf32> to vector<1xf32>
      %224 = vector.shape_cast %223 : vector<1xf32> to vector<1x1x1xf32>
      %225 = vector.extract %224[0, 0, 0] : f32 from vector<1x1x1xf32>
      %226 = vector.broadcast %225 : f32 to vector<1x1xf32>
      %227 = vector.shape_cast %226 : vector<1x1xf32> to vector<1x1xf32>
      %228 = vector.broadcast %227 : vector<1x1xf32> to vector<1x128xf32>
      %229 = arith.select %219, %228, %193 : vector<1x128xi1>, vector<1x128xf32>
      %c1_i32_144 = arith.constant 1 : i32
      %230 = vector.broadcast %c1_i32_144 : i32 to vector<1x128xi32>
      %231 = arith.cmpi eq, %166, %230 : vector<1x128xi32>
      %c1_145 = arith.constant 1 : index
      %c0_146 = arith.constant 0 : index
      %c0_147 = arith.constant 0 : index
      %232 = vector.load %arg8[%c1_145, %c0_146, %c0_147] : memref<4x2x128xf32, #tpu.memory_space<vmem>>, vector<1x2x128xf32>
      %233 = vector.shape_cast %232 : vector<1x2x128xf32> to vector<2x128xf32>
      %234 = vector.shape_cast %233 : vector<2x128xf32> to vector<1x2x128xf32>
      %cst_148 = arith.constant dense<0.000000e+00> : vector<1xf32>
      %235 = vector.multi_reduction <add>, %234, %cst_148 [1, 2] : vector<1x2x128xf32> to vector<1xf32>
      %236 = vector.shape_cast %235 : vector<1xf32> to vector<1x1x1xf32>
      %237 = vector.extract %236[0, 0, 0] : f32 from vector<1x1x1xf32>
      %238 = vector.broadcast %237 : f32 to vector<1x1xf32>
      %239 = vector.shape_cast %238 : vector<1x1xf32> to vector<1x1xf32>
      %240 = vector.broadcast %239 : vector<1x1xf32> to vector<1x128xf32>
      %241 = arith.select %231, %240, %205 : vector<1x128xi1>, vector<1x128xf32>
      %c2_i32_149 = arith.constant 2 : i32
      %242 = vector.broadcast %c2_i32_149 : i32 to vector<1x128xi32>
      %243 = arith.cmpi eq, %166, %242 : vector<1x128xi32>
      %c2_150 = arith.constant 2 : index
      %c0_151 = arith.constant 0 : index
      %c0_152 = arith.constant 0 : index
      %244 = vector.load %arg6[%c2_150, %c0_151, %c0_152] : memref<4x2x128xf32, #tpu.memory_space<vmem>>, vector<1x2x128xf32>
      %245 = vector.shape_cast %244 : vector<1x2x128xf32> to vector<2x128xf32>
      %246 = vector.shape_cast %245 : vector<2x128xf32> to vector<1x2x128xf32>
      %cst_153 = arith.constant dense<0.000000e+00> : vector<1xf32>
      %247 = vector.multi_reduction <add>, %246, %cst_153 [1, 2] : vector<1x2x128xf32> to vector<1xf32>
      %248 = vector.shape_cast %247 : vector<1xf32> to vector<1x1x1xf32>
      %249 = vector.extract %248[0, 0, 0] : f32 from vector<1x1x1xf32>
      %250 = vector.broadcast %249 : f32 to vector<1x1xf32>
      %251 = vector.shape_cast %250 : vector<1x1xf32> to vector<1x1xf32>
      %252 = vector.broadcast %251 : vector<1x1xf32> to vector<1x128xf32>
      %253 = arith.select %243, %252, %217 : vector<1x128xi1>, vector<1x128xf32>
      %c2_i32_154 = arith.constant 2 : i32
      %254 = vector.broadcast %c2_i32_154 : i32 to vector<1x128xi32>
      %255 = arith.cmpi eq, %166, %254 : vector<1x128xi32>
      %c2_155 = arith.constant 2 : index
      %c0_156 = arith.constant 0 : index
      %c0_157 = arith.constant 0 : index
      %256 = vector.load %arg7[%c2_155, %c0_156, %c0_157] : memref<4x2x128xf32, #tpu.memory_space<vmem>>, vector<1x2x128xf32>
      %257 = vector.shape_cast %256 : vector<1x2x128xf32> to vector<2x128xf32>
      %258 = vector.shape_cast %257 : vector<2x128xf32> to vector<1x2x128xf32>
      %cst_158 = arith.constant dense<0.000000e+00> : vector<1xf32>
      %259 = vector.multi_reduction <add>, %258, %cst_158 [1, 2] : vector<1x2x128xf32> to vector<1xf32>
      %260 = vector.shape_cast %259 : vector<1xf32> to vector<1x1x1xf32>
      %261 = vector.extract %260[0, 0, 0] : f32 from vector<1x1x1xf32>
      %262 = vector.broadcast %261 : f32 to vector<1x1xf32>
      %263 = vector.shape_cast %262 : vector<1x1xf32> to vector<1x1xf32>
      %264 = vector.broadcast %263 : vector<1x1xf32> to vector<1x128xf32>
      %265 = arith.select %255, %264, %229 : vector<1x128xi1>, vector<1x128xf32>
      %c2_i32_159 = arith.constant 2 : i32
      %266 = vector.broadcast %c2_i32_159 : i32 to vector<1x128xi32>
      %267 = arith.cmpi eq, %166, %266 : vector<1x128xi32>
      %c2_160 = arith.constant 2 : index
      %c0_161 = arith.constant 0 : index
      %c0_162 = arith.constant 0 : index
      %268 = vector.load %arg8[%c2_160, %c0_161, %c0_162] : memref<4x2x128xf32, #tpu.memory_space<vmem>>, vector<1x2x128xf32>
      %269 = vector.shape_cast %268 : vector<1x2x128xf32> to vector<2x128xf32>
      %270 = vector.shape_cast %269 : vector<2x128xf32> to vector<1x2x128xf32>
      %cst_163 = arith.constant dense<0.000000e+00> : vector<1xf32>
      %271 = vector.multi_reduction <add>, %270, %cst_163 [1, 2] : vector<1x2x128xf32> to vector<1xf32>
      %272 = vector.shape_cast %271 : vector<1xf32> to vector<1x1x1xf32>
      %273 = vector.extract %272[0, 0, 0] : f32 from vector<1x1x1xf32>
      %274 = vector.broadcast %273 : f32 to vector<1x1xf32>
      %275 = vector.shape_cast %274 : vector<1x1xf32> to vector<1x1xf32>
      %276 = vector.broadcast %275 : vector<1x1xf32> to vector<1x128xf32>
      %277 = arith.select %267, %276, %241 : vector<1x128xi1>, vector<1x128xf32>
      %c3_i32_164 = arith.constant 3 : i32
      %278 = vector.broadcast %c3_i32_164 : i32 to vector<1x128xi32>
      %279 = arith.cmpi eq, %166, %278 : vector<1x128xi32>
      %c3_165 = arith.constant 3 : index
      %c0_166 = arith.constant 0 : index
      %c0_167 = arith.constant 0 : index
      %280 = vector.load %arg6[%c3_165, %c0_166, %c0_167] : memref<4x2x128xf32, #tpu.memory_space<vmem>>, vector<1x2x128xf32>
      %281 = vector.shape_cast %280 : vector<1x2x128xf32> to vector<2x128xf32>
      %282 = vector.shape_cast %281 : vector<2x128xf32> to vector<1x2x128xf32>
      %cst_168 = arith.constant dense<0.000000e+00> : vector<1xf32>
      %283 = vector.multi_reduction <add>, %282, %cst_168 [1, 2] : vector<1x2x128xf32> to vector<1xf32>
      %284 = vector.shape_cast %283 : vector<1xf32> to vector<1x1x1xf32>
      %285 = vector.extract %284[0, 0, 0] : f32 from vector<1x1x1xf32>
      %286 = vector.broadcast %285 : f32 to vector<1x1xf32>
      %287 = vector.shape_cast %286 : vector<1x1xf32> to vector<1x1xf32>
      %288 = vector.broadcast %287 : vector<1x1xf32> to vector<1x128xf32>
      %289 = arith.select %279, %288, %253 : vector<1x128xi1>, vector<1x128xf32>
      %c3_i32_169 = arith.constant 3 : i32
      %290 = vector.broadcast %c3_i32_169 : i32 to vector<1x128xi32>
      %291 = arith.cmpi eq, %166, %290 : vector<1x128xi32>
      %c3_170 = arith.constant 3 : index
      %c0_171 = arith.constant 0 : index
      %c0_172 = arith.constant 0 : index
      %292 = vector.load %arg7[%c3_170, %c0_171, %c0_172] : memref<4x2x128xf32, #tpu.memory_space<vmem>>, vector<1x2x128xf32>
      %293 = vector.shape_cast %292 : vector<1x2x128xf32> to vector<2x128xf32>
      %294 = vector.shape_cast %293 : vector<2x128xf32> to vector<1x2x128xf32>
      %cst_173 = arith.constant dense<0.000000e+00> : vector<1xf32>
      %295 = vector.multi_reduction <add>, %294, %cst_173 [1, 2] : vector<1x2x128xf32> to vector<1xf32>
      %296 = vector.shape_cast %295 : vector<1xf32> to vector<1x1x1xf32>
      %297 = vector.extract %296[0, 0, 0] : f32 from vector<1x1x1xf32>
      %298 = vector.broadcast %297 : f32 to vector<1x1xf32>
      %299 = vector.shape_cast %298 : vector<1x1xf32> to vector<1x1xf32>
      %300 = vector.broadcast %299 : vector<1x1xf32> to vector<1x128xf32>
      %301 = arith.select %291, %300, %265 : vector<1x128xi1>, vector<1x128xf32>
      %c3_i32_174 = arith.constant 3 : i32
      %302 = vector.broadcast %c3_i32_174 : i32 to vector<1x128xi32>
      %303 = arith.cmpi eq, %166, %302 : vector<1x128xi32>
      %c3_175 = arith.constant 3 : index
      %c0_176 = arith.constant 0 : index
      %c0_177 = arith.constant 0 : index
      %304 = vector.load %arg8[%c3_175, %c0_176, %c0_177] : memref<4x2x128xf32, #tpu.memory_space<vmem>>, vector<1x2x128xf32>
      %305 = vector.shape_cast %304 : vector<1x2x128xf32> to vector<2x128xf32>
      %306 = vector.shape_cast %305 : vector<2x128xf32> to vector<1x2x128xf32>
      %cst_178 = arith.constant dense<0.000000e+00> : vector<1xf32>
      %307 = vector.multi_reduction <add>, %306, %cst_178 [1, 2] : vector<1x2x128xf32> to vector<1xf32>
      %308 = vector.shape_cast %307 : vector<1xf32> to vector<1x1x1xf32>
      %309 = vector.extract %308[0, 0, 0] : f32 from vector<1x1x1xf32>
      %310 = vector.broadcast %309 : f32 to vector<1x1xf32>
      %311 = vector.shape_cast %310 : vector<1x1xf32> to vector<1x1xf32>
      %312 = vector.broadcast %311 : vector<1x1xf32> to vector<1x128xf32>
      %313 = arith.select %303, %312, %277 : vector<1x128xi1>, vector<1x128xf32>
      %c0_i32_179 = arith.constant 0 : i32
      %314 = vector.broadcast %c0_i32_179 : i32 to vector<1x128xi32>
      %315 = arith.cmpi eq, %166, %314 : vector<1x128xi32>
      %c0_180 = arith.constant 0 : index
      %c0_181 = arith.constant 0 : index
      %316 = vector.load %arg9[%c0_180, %c0_181] : memref<2x128xf32, #tpu.memory_space<vmem>>, vector<2x128xf32>
      %317 = vector.shape_cast %316 : vector<2x128xf32> to vector<1x2x128xf32>
      %cst_182 = arith.constant dense<0.000000e+00> : vector<1xf32>
      %318 = vector.multi_reduction <add>, %317, %cst_182 [1, 2] : vector<1x2x128xf32> to vector<1xf32>
      %319 = vector.shape_cast %318 : vector<1xf32> to vector<1x1x1xf32>
      %320 = vector.extract %319[0, 0, 0] : f32 from vector<1x1x1xf32>
      %321 = vector.broadcast %320 : f32 to vector<1x1xf32>
      %cst_183 = arith.constant 0.000000e+00 : f32
      %322 = vector.shape_cast %321 : vector<1x1xf32> to vector<1x1xf32>
      %323 = vector.broadcast %322 : vector<1x1xf32> to vector<1x128xf32>
      %324 = vector.broadcast %cst_183 : f32 to vector<1x128xf32>
      %325 = arith.select %315, %323, %324 : vector<1x128xi1>, vector<1x128xf32>
      %326 = tpu.concatenate %289, %301, %313, %325 in 0 : vector<1x128xf32>, vector<1x128xf32>, vector<1x128xf32>, vector<1x128xf32> -> vector<4x128xf32>
      %327 = vector.shape_cast %326 : vector<4x128xf32> to vector<1x1x4x128xf32>
      %c0_184 = arith.constant 0 : index
      %c0_185 = arith.constant 0 : index
      %c0_186 = arith.constant 0 : index
      %c0_187 = arith.constant 0 : index
      %328 = vector.load %arg5[%c0_184, %c0_185, %c0_186, %c0_187] : memref<1x1x4x128xf32, #tpu.memory_space<vmem>>, vector<1x1x4x128xf32>
      tpu.vector_store %arg5[%c0_184, %c0_185, %c0_186, %c0_187], %327 {strides = array<i32>} : memref<1x1x4x128xf32, #tpu.memory_space<vmem>>, vector<1x1x4x128xf32>,
    } else {
    }
    return
  }
  func.func @transform_0(%arg0: i32, %arg1: i32, %arg2: i32) -> (i32, i32, i32, i32) {
    %c1_i32 = arith.constant 1 : i32
    %0 = arith.muli %arg1, %c1_i32 : i32
    %1 = arith.addi %0, %arg2 : i32
    %c0_i32 = arith.constant 0 : i32
    %2 = arith.minsi %1, %c0_i32 : i32
    %c0_i32_0 = arith.constant 0 : i32
    %c0_i32_1 = arith.constant 0 : i32
    %c0_i32_2 = arith.constant 0 : i32
    return %arg0, %c0_i32_0, %2, %c0_i32_1 : i32, i32, i32, i32
  }
  func.func @transform_1(%arg0: i32, %arg1: i32, %arg2: i32) -> (i32, i32, i32, i32) {
    %c1_i32 = arith.constant 1 : i32
    %0 = arith.muli %arg1, %c1_i32 : i32
    %1 = arith.addi %0, %arg2 : i32
    %c0_i32 = arith.constant 0 : i32
    %2 = arith.minsi %1, %c0_i32 : i32
    %c0_i32_0 = arith.constant 0 : i32
    %c0_i32_1 = arith.constant 0 : i32
    %c0_i32_2 = arith.constant 0 : i32
    return %arg0, %c0_i32_0, %2, %c0_i32_1 : i32, i32, i32, i32
  }
  func.func @transform_2(%arg0: i32, %arg1: i32, %arg2: i32) -> (i32, i32, i32, i32) {
    %c0_i32 = arith.constant 0 : i32
    %c0_i32_0 = arith.constant 0 : i32
    %c0_i32_1 = arith.constant 0 : i32
    return %arg0, %arg1, %c0_i32, %c0_i32_0 : i32, i32, i32, i32
  }
}

</mosaic_0001>

<llo_original>
// kernel: tpu_custom_call.1
$region0: #{tpu_custom_call.1}
  #allocation0 [shape = 'u32[]', space=smem, size = 0x4, offset = 0x4, fixed_abs, tag = 'smem constant byte address 0x4 - core index']
  #allocation1 [shape = 'u32[72,128]{1,0:T(1,128)}', space=vmem, size = 0x9000, scoped, tag = 'internal scratch']
  #allocation2 [shape = 'f32[4,2,128]{2,1,0:T(2,128)}', space=vmem, size = 0x1000, scoped, tag = 'scratch operand']
  #allocation3 [shape = 'f32[4,2,128]{2,1,0:T(2,128)}', space=vmem, size = 0x1000, scoped, tag = 'scratch operand']
  #allocation4 [shape = 'f32[4,2,128]{2,1,0:T(2,128)}', space=vmem, size = 0x1000, scoped, tag = 'scratch operand']
  #allocation5 [shape = 'f32[2,128]{1,0:T(2,128)}', space=vmem, size = 0x400, scoped, tag = 'scratch operand']
  %s0 = inlined_call_operand.hbm [shape: f32[2,4,2,128], index: 0, kind: input, shape index: {}]
  %s1 = inlined_call_operand.hbm [shape: s8[2,1,2,128], index: 1, kind: input, shape index: {}]
  %s2 = inlined_call_operand.hbm [shape: f32[2,1,4,128], index: 2, kind: output, shape index: {}]
  %s3 = sld [smem:[#allocation0]]
  $region57: #{tpu_custom_call.1} parent=0
    _
  %s5 = ssub.s32 1, %s3
  %s6 = scalar_select 0, %s5, %s3
  $region1: #{tpu_custom_call.1} parent=0
    #allocation6 [shape = 'u8[8192]{0}', space=vmem, size = 0x2000, scoped, tag = 'input window, operand 0']
    #allocation7 [shape = 's32[2]{0}', space=sflag, size = 0x8, scoped, tag = 'scoped memory for tpu_custom_call.1']
    #allocation8 [shape = 's32[2]{0}', space=sflag, size = 0x8, scoped, tag = 'scoped memory for tpu_custom_call.1']
    #allocation9 [shape = 'u8[1024]{0}', space=vmem, size = 0x400, scoped, tag = 'input window, operand 1']
    #allocation10 [shape = 's32[2]{0}', space=sflag, size = 0x8, scoped, tag = 'scoped memory for tpu_custom_call.1']
    #allocation11 [shape = 'u8[4096]{0}', space=vmem, size = 0x1000, scoped, tag = 'output window, operand 0']
    %7 = vsyncpa [#allocation7], 0
    %s8 = scalar_lea.sflag [#allocation7], 1
    %9 = vsyncpa %s8, 0
    %10 = vsyncpa [#allocation10], 0
    %s11 = scalar_lea.sflag [#allocation10], 1
    %12 = vsyncpa %s11, 0
    %13 = vsyncpa [#allocation8], 0
    %s14 = scalar_lea.sflag [#allocation8], 1
    %15 = vsyncpa %s14, 0
    loop: start=0, step=1, limit=4
    $region2: #{tpu_custom_call.1} parent=1 // loop_pre_header
      _
    $region3: #{tpu_custom_call.1} parent=1 // loop_header
      %s17 = sphi 0, %s21
      %p18 = scmp.ge.s32.totalorder %s17, 4
      %s24 = sphi 0, %s43
      %s25 = sphi 0, %s39
      %s26 = sphi 0, %s35
      %s27 = sphi 0, %s24
      %s28 = sphi 0, %s25
      %s29 = sphi 0, %s26
      %s30 = sphi 0, %s27
      %s31 = sphi 0, %s28
      %s32 = sphi 0, %s29
      %s54 = sphi 0, %s56
      %s57 = sphi 0, %s54
      %s58 = sphi 0, %s57
      %s74 = sphi 0, %s58
      %s88 = sphi 0, %s90
      %s91 = sphi 0, %s88
      %s92 = sphi 0, %s91
      %s108 = sphi 0, %s92
      %s116 = sphi 0, %s118
      %s119 = sphi 0, %s116
      %s120 = sphi 0, %s119
      %s136 = sphi 0, %s120
    $region4: #{tpu_custom_call.1} parent=1 // loop_header_branch
      %20 = sbr.rel (%p18) target = $region8
    $region5: #{tpu_custom_call.1} parent=1 // loop_body
      %s22 = ssub.s32 %s17, 1
      %s23 = ssub.s32 %s17, 2
      %s33 = sadd.s32 1, %s26
      %p34 = scmp.ge.s32.totalorder %s33, 1
      %s35 = scalar_select %p34, 0, %s33
      %s36 = sadd.s32 1, %s25
      %s37 = scalar_select %p34, %s36, %s25
      %p38 = scmp.ge.s32.totalorder %s37, 1
      %s39 = scalar_select %p38, 0, %s37
      %s40 = sadd.s32 1, %s24
      %s41 = scalar_select %p38, %s40, %s24
      %p42 = scmp.ge.s32.totalorder %s41, 2
      %s43 = scalar_select %p42, 0, %s41
      %s44 = sadd.s32 %s25, %s26
      %p45 = scmp.lt.s32.totalorder %s44, 0
      %s46 = scalar_select %p45, %s44, 0
      %s47 = sadd.s32 %s39, %s35
      %p48 = scmp.lt.s32.totalorder %s47, 0
      %s49 = scalar_select %p48, %s47, 0
      %s50 = ssub.s32 %s24, %s43
      %s51 = ssub.s32 %s46, %s49
      %s52 = sor.u32 %s50, %s51
      %p53 = scmp.eq.s32.totalorder %s52, 0
      %s55 = sadd.s32 %s54, 1
      %s56 = scalar_select %p53, %s54, %s55
      %p59 = pneg %p53
      %p60 = scmp.eq.s32.totalorder %s17, 1
      %p61 = por %p59, %p60
      %p62 = scmp.ne.s32.totalorder %s54, %s57
      %p63 = scmp.eq.s32.totalorder %s17, 0
      %p64 = por %p62, %p63
      %p65 = scmp.ne.s32.totalorder %s54, %s57
      %p66 = scmp.eq.s32.totalorder %s22, 1
      %p67 = por %p65, %p66
      %p68 = scmp.ne.s32.totalorder %s57, %s58
      %p69 = scmp.eq.s32.totalorder %s22, 0
      %p70 = por %p68, %p69
      %p71 = scmp.ne.s32.totalorder %s57, %s58
      %p72 = scmp.eq.s32.totalorder %s23, 1
      %p73 = por %p71, %p72
      %p75 = scmp.ne.s32.totalorder %s58, %s74
      %p76 = scmp.eq.s32.totalorder %s23, 0
      %p77 = por %p75, %p76
      %s78 = sadd.s32 %s25, %s26
      %p79 = scmp.lt.s32.totalorder %s78, 0
      %s80 = scalar_select %p79, %s78, 0
      %s81 = sadd.s32 %s39, %s35
      %p82 = scmp.lt.s32.totalorder %s81, 0
      %s83 = scalar_select %p82, %s81, 0
      %s84 = ssub.s32 %s24, %s43
      %s85 = ssub.s32 %s80, %s83
      %s86 = sor.u32 %s84, %s85
      %p87 = scmp.eq.s32.totalorder %s86, 0
      %s89 = sadd.s32 %s88, 1
      %s90 = scalar_select %p87, %s88, %s89
      %p93 = pneg %p87
      %p94 = scmp.eq.s32.totalorder %s17, 1
      %p95 = por %p93, %p94
      %p96 = scmp.ne.s32.totalorder %s88, %s91
      %p97 = scmp.eq.s32.totalorder %s17, 0
      %p98 = por %p96, %p97
      %p99 = scmp.ne.s32.totalorder %s88, %s91
      %p100 = scmp.eq.s32.totalorder %s22, 1
      %p101 = por %p99, %p100
      %p102 = scmp.ne.s32.totalorder %s91, %s92
      %p103 = scmp.eq.s32.totalorder %s22, 0
      %p104 = por %p102, %p103
      %p105 = scmp.ne.s32.totalorder %s91, %s92
      %p106 = scmp.eq.s32.totalorder %s23, 1
      %p107 = por %p105, %p106
      %p109 = scmp.ne.s32.totalorder %s92, %s108
      %p110 = scmp.eq.s32.totalorder %s23, 0
      %p111 = por %p109, %p110
      %s112 = ssub.s32 %s24, %s43
      %s113 = ssub.s32 %s25, %s39
      %s114 = sor.u32 %s112, %s113
      %p115 = scmp.eq.s32.totalorder %s114, 0
      %s117 = sadd.s32 %s116, 1
      %s118 = scalar_select %p115, %s116, %s117
      %p121 = pneg %p115
      %p122 = scmp.eq.s32.totalorder %s17, 1
      %p123 = por %p121, %p122
      %p124 = scmp.ne.s32.totalorder %s116, %s119
      %p125 = scmp.eq.s32.totalorder %s17, 0
      %p126 = por %p124, %p125
      %p127 = scmp.ne.s32.totalorder %s116, %s119
      %p128 = scmp.eq.s32.totalorder %s22, 1
      %p129 = por %p127, %p128
      %p130 = scmp.ne.s32.totalorder %s119, %s120
      %p131 = scmp.eq.s32.totalorder %s22, 0
      %p132 = por %p130, %p131
      %p133 = scmp.ne.s32.totalorder %s119, %s120
      %p134 = scmp.eq.s32.totalorder %s23, 1
      %p135 = por %p133, %p134
      %p137 = scmp.ne.s32.totalorder %s120, %s136
      %p138 = scmp.eq.s32.totalorder %s23, 0
      %p139 = por %p137, %p138
      %p140 = scmp.le.s32.totalorder 1, %s17
      %p141 = scmp.lt.s32.totalorder %s17, 3
      %p142 = pnand %p140, %p141
      %p143 = pneg %p142
      // Predicated region
      $region9: #{tpu_custom_call.1} parent=5 // pred_check
        _
      $region10: #{tpu_custom_call.1} parent=5 // pred_check_branch
        %145 = sbr.rel (%p142) target = $region12
      $region11: #{tpu_custom_call.1} parent=5 // pred_region
        %s146 = ssub.s32 %s17, 1
      $region12: #{tpu_custom_call.1} parent=5 // pred_fallthru
        _
      %p147 = scmp.lt.s32.totalorder %s17, 2
      // Predicated region
      $region13: #{tpu_custom_call.1} parent=5 // pred_check
        %p148 = pneg %p147
      $region14: #{tpu_custom_call.1} parent=5 // pred_check_branch
        %150 = sbr.rel (%p148) target = $region16
      $region15: #{tpu_custom_call.1} parent=5 // pred_region
        // Predicated region
        $region17: #{tpu_custom_call.1} parent=15 // pred_check
          %p151 = pneg %p64
        $region18: #{tpu_custom_call.1} parent=15 // pred_check_branch
          %153 = sbr.rel (%p151) target = $region20
        $region19: #{tpu_custom_call.1} parent=15 // pred_region
          %s154 = sand.u32 %s54, 1
          %s155 = scalar_lea.sflag [#allocation7], %s154
          %s156 = sand.u32 %s54, 1
          %s157 = smul.addr %s156, 8
          %s158 = scalar_lea.vmem [#allocation6], %s157
          %s159 = sadd.s32 %s25, %s26
          %p160 = scmp.lt.s32.totalorder %s159, 0
          %s161 = scalar_select %p160, %s159, 0
          %163 = vsyncadd %s155, 0
          %s164 = smul.addr %s24, 4
          %s165 = sadd.s32 %s161, %s164
          %s166 = smul.addr %s165, 2
          %s167 = scalar_lea.hbm %s0, %s166
          %s168 = sshll.u32 %s167, 4
          %s169 = int_to_ptr.hbm [resolvable:$true] %s168
          %s170 = sshll.u32 %s158, 4
          %s171 = int_to_ptr.vmem [resolvable:$true] %s170
          %176 = dma.hbm_to_vmem [thread:$0]  %s169, 128, %s171, %s155, 32, 32, 2
        $region20: #{tpu_custom_call.1} parent=15 // pred_fallthru
          _
        // Predicated region
        $region21: #{tpu_custom_call.1} parent=15 // pred_check
          %p177 = pneg %p98
        $region22: #{tpu_custom_call.1} parent=15 // pred_check_branch
          %179 = sbr.rel (%p177) target = $region24
        $region23: #{tpu_custom_call.1} parent=15 // pred_region
          %s180 = sand.u32 %s88, 1
          %s181 = scalar_lea.sflag [#allocation10], %s180
          %s182 = sand.u32 %s88, 1
          %s183 = scalar_lea.vmem [#allocation9], %s182
          %s184 = sadd.s32 %s25, %s26
          %p185 = scmp.lt.s32.totalorder %s184, 0
          %s186 = scalar_select %p185, %s184, 0
          %188 = vsyncadd %s181, 0
          %s189 = sadd.s32 %s186, %s24
          %s190 = scalar_lea.hbm %s1, %s189
          %s192 = sshll.u32 %s190, 4
          %s193 = int_to_ptr.hbm [resolvable:$true] %s192
          %s194 = sshll.u32 %s183, 4
          %s195 = int_to_ptr.vmem [resolvable:$true] %s194
          %197 = dma.hbm_to_vmem [thread:$0]  %s193, 16, %s195, %s181
        $region24: #{tpu_custom_call.1} parent=15 // pred_fallthru
          _
      $region16: #{tpu_custom_call.1} parent=5 // pred_fallthru
        _
      %p198 = scmp.le.s32.totalorder 1, %s17
      %p199 = scmp.lt.s32.totalorder %s17, 3
      %p200 = pnand %p198, %p199
      %p201 = pneg %p200
      // Predicated region
      $region25: #{tpu_custom_call.1} parent=5 // pred_check
        _
      $region26: #{tpu_custom_call.1} parent=5 // pred_check_branch
        %203 = sbr.rel (%p200) target = $region28
      $region27: #{tpu_custom_call.1} parent=5 // pred_region
        %s204 = ssub.s32 %s17, 1
        %s205 = sand.u32 %s57, 1
        %s206 = scalar_lea.sflag [#allocation7], %s205
        %s207 = sand.u32 %s57, 1
        %s208 = smul.addr %s207, 8
        %s209 = scalar_lea.vmem [#allocation6], %s208
        // Predicated region
        $region29: #{tpu_custom_call.1} parent=27 // pred_check
          %p210 = pneg %p70
        $region30: #{tpu_custom_call.1} parent=27 // pred_check_branch
          %212 = sbr.rel (%p210) target = $region32
        $region31: #{tpu_custom_call.1} parent=27 // pred_region
          %214 = dma.done %s206, 128
        $region32: #{tpu_custom_call.1} parent=27 // pred_fallthru
          _
        %s215 = sand.u32 %s91, 1
        %s216 = scalar_lea.sflag [#allocation10], %s215
        %s217 = sand.u32 %s91, 1
        %s218 = scalar_lea.vmem [#allocation9], %s217
        // Predicated region
        $region33: #{tpu_custom_call.1} parent=27 // pred_check
          %p219 = pneg %p104
        $region34: #{tpu_custom_call.1} parent=27 // pred_check_branch
          %221 = sbr.rel (%p219) target = $region36
        $region35: #{tpu_custom_call.1} parent=27 // pred_region
          %223 = dma.done %s216, 16
        $region36: #{tpu_custom_call.1} parent=27 // pred_fallthru
          _
        %s224 = sand.u32 %s57, 1
        %s225 = scalar_lea.sflag [#allocation7], %s224
        %s226 = sand.u32 %s57, 1
        %s227 = smul.addr %s226, 8
        %s228 = scalar_lea.vmem [#allocation6], %s227
        %p229 = pneg %p70
        %p230 = pneg %p67
        %s231 = sand.u32 %s91, 1
        %s232 = scalar_lea.sflag [#allocation10], %s231
        %s233 = sand.u32 %s91, 1
        %s234 = scalar_lea.vmem [#allocation9], %s233
        %p235 = pneg %p104
        %p236 = pneg %p101
        %p237 = pneg %p132
        %p238 = pneg %p129
        %s239 = sand.u32 %s119, 1
        %s240 = scalar_lea.sflag [#allocation8], %s239
        %s241 = sand.u32 %s119, 1
        %s242 = smul.addr %s241, 4
        %s243 = scalar_lea.vmem [#allocation11], %s242
        %s244 = sadd.s32 %s28, %s29
        %p245 = scmp.lt.s32.totalorder %s244, 0
        %s246 = scalar_select %p245, %s244, 0
        %s247 = sadd.s32 %s28, %s29
        %p248 = scmp.lt.s32.totalorder %s247, 0
        %s249 = scalar_select %p248, %s247, 0
        %p250 = scmp.eq.s32.totalorder %s29, 0
        // Predicated region
        $region37: #{tpu_custom_call.1} parent=27 // pred_check
          %p251 = pneg %p250
        $region38: #{tpu_custom_call.1} parent=27 // pred_check_branch
          %253 = sbr.rel (%p251) target = $region40
        $region39: #{tpu_custom_call.1} parent=27 // pred_region
          %254 = vst [vmem:[#allocation2] sm:$0x3] 0.0
          %255 = vst [vmem:[#allocation2 + $0x2] sm:$0x3] 0.0
          %256 = vst [vmem:[#allocation2 + $0x4] sm:$0x3] 0.0
          %257 = vst [vmem:[#allocation2 + $0x6] sm:$0x3] 0.0
          %258 = vst [vmem:[#allocation3] sm:$0x3] 0.0
          %259 = vst [vmem:[#allocation3 + $0x2] sm:$0x3] 0.0
          %260 = vst [vmem:[#allocation3 + $0x4] sm:$0x3] 0.0
          %261 = vst [vmem:[#allocation3 + $0x6] sm:$0x3] 0.0
          %262 = vst [vmem:[#allocation4] sm:$0x3] 0.0
          %263 = vst [vmem:[#allocation4 + $0x2] sm:$0x3] 0.0
          %264 = vst [vmem:[#allocation4 + $0x4] sm:$0x3] 0.0
          %265 = vst [vmem:[#allocation4 + $0x6] sm:$0x3] 0.0
          %266 = vst [vmem:[#allocation5] sm:$0x3] 0.0
        $region40: #{tpu_custom_call.1} parent=27 // pred_fallthru
          _
        %v267 = vld [vmem:[%s218] sm:$0x1]
        %v268 = vunpack.c.0.s8 %v267
        %v269 = vld [vmem:[%s209] sm:$0x3]
        %s270 = scalar_lea.vmem %s209, 2 [#allocation6]
        %v271 = vld [vmem:[%s270] sm:$0x3]
        %v272 = vmax.f32 %v269, %v271
        %s273 = scalar_lea.vmem %s209, 4 [#allocation6]
        %v274 = vld [vmem:[%s273] sm:$0x3]
        %v275 = vmax.f32 %v272, %v274
        %s276 = scalar_lea.vmem %s209, 6 [#allocation6]
        %v277 = vld [vmem:[%s276] sm:$0x3]
        %v278 = vmax.f32 %v275, %v277
        %v279 = vsub.f32 %v269, %v278
        %vm280 = vcmp.eq.s32.totalorder %v268, 0
        %v281 = vsel %vm280, 1, 0
        %v282 = vcvt.s32.f32 %v281
        %v283 = vmul.f32 %v282, %v279
        %v284 = vadd.f32 %v283, 0.0
        %v285 = vmul.f32 %v279, 1.442695
        %v286 = vpow.pop %v285
        %v287 = vsub.f32 %v271, %v278
        %vm288 = vcmp.eq.s32.totalorder %v268, 1
        %v289 = vsel %vm288, 1, 0
        %v290 = vcvt.s32.f32 %v289
        %v291 = vmul.f32 %v290, %v287
        %v292 = vadd.f32 %v284, %v291
        %v293 = vmul.f32 %v287, 1.442695
        %v294 = vpow.pop %v293
        %v295 = vsub.f32 %v274, %v278
        %vm296 = vcmp.eq.s32.totalorder %v268, 2
        %v297 = vsel %vm296, 1, 0
        %v298 = vcvt.s32.f32 %v297
        %v299 = vmul.f32 %v298, %v295
        %v300 = vadd.f32 %v292, %v299
        %v301 = vmul.f32 %v295, 1.442695
        %v302 = vpow.pop %v301
        %v303 = vsub.f32 %v277, %v278
        %vm304 = vcmp.eq.s32.totalorder %v268, 3
        %v305 = vsel %vm304, 1, 0
        %v306 = vcvt.s32.f32 %v305
        %v307 = vmul.f32 %v306, %v303
        %v308 = vadd.f32 %v300, %v307
        %v309 = vmul.f32 %v303, 1.442695
        %v310 = vpow.pop %v309
        %v311 = vadd.f32 %v286, %v294
        %v312 = vadd.f32 %v311, %v302
        %v313 = vadd.f32 %v312, %v310
        %v314 = vrcp.pop %v313
        %v315 = vlog2.pop %v313
        %v316 = vmul.f32 %v315, 0.6931472
        %v317 = vmul.f32 %v286, %v314
        %v318 = vld [vmem:[#allocation2] sm:$0x3]
        %v319 = vmul.f32 %v317, %v282
        %v320 = vadd.f32 %v318, %v319
        %321 = vst [vmem:[#allocation2] sm:$0x3] %v320
        %v322 = vld [vmem:[#allocation3] sm:$0x3]
        %v323 = vadd.f32 %v322, %v317
        %324 = vst [vmem:[#allocation3] sm:$0x3] %v323
        %v325 = vld [vmem:[#allocation4] sm:$0x3]
        %v326 = vadd.f32 %v325, %v282
        %327 = vst [vmem:[#allocation4] sm:$0x3] %v326
        %v328 = vmul.f32 %v294, %v314
        %s329 = scalar_lea.vmem [#allocation2], 2
        %v330 = vld [vmem:[%s329] sm:$0x3]
        %v331 = vmul.f32 %v328, %v290
        %v332 = vadd.f32 %v330, %v331
        %333 = vst [vmem:[%s329] sm:$0x3] %v332
        %s334 = scalar_lea.vmem [#allocation3], 2
        %v335 = vld [vmem:[%s334] sm:$0x3]
        %v336 = vadd.f32 %v335, %v328
        %337 = vst [vmem:[%s334] sm:$0x3] %v336
        %s338 = scalar_lea.vmem [#allocation4], 2
        %v339 = vld [vmem:[%s338] sm:$0x3]
        %v340 = vadd.f32 %v339, %v290
        %341 = vst [vmem:[%s338] sm:$0x3] %v340
        %v342 = vmul.f32 %v302, %v314
        %s343 = scalar_lea.vmem [#allocation2], 4
        %v344 = vld [vmem:[%s343] sm:$0x3]
        %v345 = vmul.f32 %v342, %v298
        %v346 = vadd.f32 %v344, %v345
        %347 = vst [vmem:[%s343] sm:$0x3] %v346
        %s348 = scalar_lea.vmem [#allocation3], 4
        %v349 = vld [vmem:[%s348] sm:$0x3]
        %v350 = vadd.f32 %v349, %v342
        %351 = vst [vmem:[%s348] sm:$0x3] %v350
        %s352 = scalar_lea.vmem [#allocation4], 4
        %v353 = vld [vmem:[%s352] sm:$0x3]
        %v354 = vadd.f32 %v353, %v298
        %355 = vst [vmem:[%s352] sm:$0x3] %v354
        %v356 = vmul.f32 %v310, %v314
        %s357 = scalar_lea.vmem [#allocation2], 6
        %v358 = vld [vmem:[%s357] sm:$0x3]
        %v359 = vmul.f32 %v356, %v306
        %v360 = vadd.f32 %v358, %v359
        %361 = vst [vmem:[%s357] sm:$0x3] %v360
        %s362 = scalar_lea.vmem [#allocation3], 6
        %v363 = vld [vmem:[%s362] sm:$0x3]
        %v364 = vadd.f32 %v363, %v356
        %365 = vst [vmem:[%s362] sm:$0x3] %v364
        %s366 = scalar_lea.vmem [#allocation4], 6
        %v367 = vld [vmem:[%s366] sm:$0x3]
        %v368 = vadd.f32 %v367, %v306
        %369 = vst [vmem:[%s366] sm:$0x3] %v368
        %v370 = vld [vmem:[#allocation5] sm:$0x3]
        %v371 = vsub.f32 %v316, %v308
        %v372 = vadd.f32 %v370, %v371
        %373 = vst [vmem:[#allocation5] sm:$0x3] %v372
        // Predicated region
        $region41: #{tpu_custom_call.1} parent=27 // pred_check
          %p374 = pneg %p250
        $region42: #{tpu_custom_call.1} parent=27 // pred_check_branch
          %376 = sbr.rel (%p374) target = $region44
        $region43: #{tpu_custom_call.1} parent=27 // pred_region
          %v377 = vlaneseq
          %v378 = vand.u32 %v377, 127
          %vm379 = vcmp.eq.s32.totalorder %v378, 0
          %v380 = vld [vmem:[#allocation2] sm:$0x3]
          %vm381 = vcmask 1041408
          %v382 = vsel %vm381, %v380, 0.0
          %383 = vadd.xlane.f32.xlu0 %v382
          %v384 = vpop.xlane.xlu0 %383
          %v385 = vrot.slane %v384, 4
          %v386 = vadd.f32 %v384, %v385
          %v387 = vrot.slane %v386, 2
          %v388 = vadd.f32 %v386, %v387
          %v389 = vrot.slane %v388, 1
          %v390 = vadd.f32 %v388, %v389
          %s391 = vtos %v390
          %v392 = vstv %s391
          %v393 = vsel %vm379, %v392, 0.0
          %v394 = vld [vmem:[#allocation3] sm:$0x3]
          %v395 = vsel %vm381, %v394, 0.0
          %396 = vadd.xlane.f32.xlu0 %v395
          %v397 = vpop.xlane.xlu0 %396
          %v398 = vrot.slane %v397, 4
          %v399 = vadd.f32 %v397, %v398
          %v400 = vrot.slane %v399, 2
          %v401 = vadd.f32 %v399, %v400
          %v402 = vrot.slane %v401, 1
          %v403 = vadd.f32 %v401, %v402
          %s404 = vtos %v403
          %v405 = vstv %s404
          %v406 = vsel %vm379, %v405, 0.0
          %v407 = vld [vmem:[#allocation4] sm:$0x3]
          %v408 = vsel %vm381, %v407, 0.0
          %409 = vadd.xlane.f32.xlu0 %v408
          %v410 = vpop.xlane.xlu0 %409
          %v411 = vrot.slane %v410, 4
          %v412 = vadd.f32 %v410, %v411
          %v413 = vrot.slane %v412, 2
          %v414 = vadd.f32 %v412, %v413
          %v415 = vrot.slane %v414, 1
          %v416 = vadd.f32 %v414, %v415
          %s417 = vtos %v416
          %v418 = vstv %s417
          %v419 = vsel %vm379, %v418, 0.0
          %vm420 = vcmp.eq.s32.totalorder %v378, 1
          %v421 = vld [vmem:[%s329] sm:$0x3]
          %v422 = vsel %vm381, %v421, 0.0
          %423 = vadd.xlane.f32.xlu0 %v422
          %v424 = vpop.xlane.xlu0 %423
          %v425 = vrot.slane %v424, 4
          %v426 = vadd.f32 %v424, %v425
          %v427 = vrot.slane %v426, 2
          %v428 = vadd.f32 %v426, %v427
          %v429 = vrot.slane %v428, 1
          %v430 = vadd.f32 %v428, %v429
          %s431 = vtos %v430
          %v432 = vstv %s431
          %v433 = vsel %vm420, %v432, %v393
          %v434 = vld [vmem:[%s334] sm:$0x3]
          %v435 = vsel %vm381, %v434, 0.0
          %436 = vadd.xlane.f32.xlu0 %v435
          %v437 = vpop.xlane.xlu0 %436
          %v438 = vrot.slane %v437, 4
          %v439 = vadd.f32 %v437, %v438
          %v440 = vrot.slane %v439, 2
          %v441 = vadd.f32 %v439, %v440
          %v442 = vrot.slane %v441, 1
          %v443 = vadd.f32 %v441, %v442
          %s444 = vtos %v443
          %v445 = vstv %s444
          %v446 = vsel %vm420, %v445, %v406
          %v447 = vld [vmem:[%s338] sm:$0x3]
          %v448 = vsel %vm381, %v447, 0.0
          %449 = vadd.xlane.f32.xlu0 %v448
          %v450 = vpop.xlane.xlu0 %449
          %v451 = vrot.slane %v450, 4
          %v452 = vadd.f32 %v450, %v451
          %v453 = vrot.slane %v452, 2
          %v454 = vadd.f32 %v452, %v453
          %v455 = vrot.slane %v454, 1
          %v456 = vadd.f32 %v454, %v455
          %s457 = vtos %v456
          %v458 = vstv %s457
          %v459 = vsel %vm420, %v458, %v419
          %vm460 = vcmp.eq.s32.totalorder %v378, 2
          %v461 = vld [vmem:[%s343] sm:$0x3]
          %v462 = vsel %vm381, %v461, 0.0
          %463 = vadd.xlane.f32.xlu0 %v462
          %v464 = vpop.xlane.xlu0 %463
          %v465 = vrot.slane %v464, 4
          %v466 = vadd.f32 %v464, %v465
          %v467 = vrot.slane %v466, 2
          %v468 = vadd.f32 %v466, %v467
          %v469 = vrot.slane %v468, 1
          %v470 = vadd.f32 %v468, %v469
          %s471 = vtos %v470
          %v472 = vstv %s471
          %v473 = vsel %vm460, %v472, %v433
          %v474 = vld [vmem:[%s348] sm:$0x3]
          %v475 = vsel %vm381, %v474, 0.0
          %476 = vadd.xlane.f32.xlu0 %v475
          %v477 = vpop.xlane.xlu0 %476
          %v478 = vrot.slane %v477, 4
          %v479 = vadd.f32 %v477, %v478
          %v480 = vrot.slane %v479, 2
          %v481 = vadd.f32 %v479, %v480
          %v482 = vrot.slane %v481, 1
          %v483 = vadd.f32 %v481, %v482
          %s484 = vtos %v483
          %v485 = vstv %s484
          %v486 = vsel %vm460, %v485, %v446
          %v487 = vld [vmem:[%s352] sm:$0x3]
          %v488 = vsel %vm381, %v487, 0.0
          %489 = vadd.xlane.f32.xlu0 %v488
          %v490 = vpop.xlane.xlu0 %489
          %v491 = vrot.slane %v490, 4
          %v492 = vadd.f32 %v490, %v491
          %v493 = vrot.slane %v492, 2
          %v494 = vadd.f32 %v492, %v493
          %v495 = vrot.slane %v494, 1
          %v496 = vadd.f32 %v494, %v495
          %s497 = vtos %v496
          %v498 = vstv %s497
          %v499 = vsel %vm460, %v498, %v459
          %vm500 = vcmp.eq.s32.totalorder %v378, 3
          %v501 = vld [vmem:[%s357] sm:$0x3]
          %v502 = vsel %vm381, %v501, 0.0
          %503 = vadd.xlane.f32.xlu0 %v502
          %v504 = vpop.xlane.xlu0 %503
          %v505 = vrot.slane %v504, 4
          %v506 = vadd.f32 %v504, %v505
          %v507 = vrot.slane %v506, 2
          %v508 = vadd.f32 %v506, %v507
          %v509 = vrot.slane %v508, 1
          %v510 = vadd.f32 %v508, %v509
          %s511 = vtos %v510
          %v512 = vstv %s511
          %v513 = vsel %vm500, %v512, %v473
          %v514 = vld [vmem:[%s362] sm:$0x3]
          %v515 = vsel %vm381, %v514, 0.0
          %516 = vadd.xlane.f32.xlu0 %v515
          %v517 = vpop.xlane.xlu0 %516
          %v518 = vrot.slane %v517, 4
          %v519 = vadd.f32 %v517, %v518
          %v520 = vrot.slane %v519, 2
          %v521 = vadd.f32 %v519, %v520
          %v522 = vrot.slane %v521, 1
          %v523 = vadd.f32 %v521, %v522
          %s524 = vtos %v523
          %v525 = vstv %s524
          %v526 = vsel %vm500, %v525, %v486
          %v527 = vld [vmem:[%s366] sm:$0x3]
          %v528 = vsel %vm381, %v527, 0.0
          %529 = vadd.xlane.f32.xlu0 %v528
          %v530 = vpop.xlane.xlu0 %529
          %v531 = vrot.slane %v530, 4
          %v532 = vadd.f32 %v530, %v531
          %v533 = vrot.slane %v532, 2
          %v534 = vadd.f32 %v532, %v533
          %v535 = vrot.slane %v534, 1
          %v536 = vadd.f32 %v534, %v535
          %s537 = vtos %v536
          %v538 = vstv %s537
          %v539 = vsel %vm500, %v538, %v499
          %v540 = vld [vmem:[#allocation5] sm:$0x3]
          %v541 = vsel %vm381, %v540, 0.0
          %542 = vadd.xlane.f32.xlu0 %v541
          %v543 = vpop.xlane.xlu0 %542
          %v544 = vrot.slane %v543, 4
          %v545 = vadd.f32 %v543, %v544
          %v546 = vrot.slane %v545, 2
          %v547 = vadd.f32 %v545, %v546
          %v548 = vrot.slane %v547, 1
          %v549 = vadd.f32 %v547, %v548
          %s550 = vtos %v549
          %v551 = vstv %s550
          %v552 = vsel %vm379, %v551, 0.0
          %vm553 = vcmask 1040384
          %v554 = vsel %vm553, %v513, %v526
          %v555 = vsel %vm381, %v554, %v539
          %vm556 = vcmask 1042432
          %v557 = vsel %vm556, %v555, %v552
          %558 = vst [vmem:[%s243] sm:$0xf] %v557
        $region44: #{tpu_custom_call.1} parent=27 // pred_fallthru
          _
        %s559 = sand.u32 %s119, 1
        %s560 = scalar_lea.sflag [#allocation8], %s559
        %s561 = sand.u32 %s119, 1
        %s562 = smul.addr %s561, 4
        %s563 = scalar_lea.vmem [#allocation11], %s562
        // Predicated region
        $region45: #{tpu_custom_call.1} parent=27 // pred_check
          %p564 = pneg %p129
        $region46: #{tpu_custom_call.1} parent=27 // pred_check_branch
          %566 = sbr.rel (%p564) target = $region48
        $region47: #{tpu_custom_call.1} parent=27 // pred_region
          %568 = vsyncadd %s560, 0
          %s569 = sadd.s32 %s28, %s27
          %s570 = smul.addr %s569, 4
          %s571 = scalar_lea.hbm %s2, %s570
          %s573 = sshll.u32 %s563, 4
          %s574 = int_to_ptr.vmem [resolvable:$true] %s573
          %s575 = sshll.u32 %s571, 4
          %s576 = int_to_ptr.hbm [resolvable:$true] %s575
          %578 = dma.vmem_to_hbm [thread:$0]  %s574, 64, %s576, %s560
        $region48: #{tpu_custom_call.1} parent=27 // pred_fallthru
          _
      $region28: #{tpu_custom_call.1} parent=5 // pred_fallthru
        _
      %p579 = scmp.le.s32.totalorder 2, %s17
      // Predicated region
      $region49: #{tpu_custom_call.1} parent=5 // pred_check
        %p580 = pneg %p579
      $region50: #{tpu_custom_call.1} parent=5 // pred_check_branch
        %582 = sbr.rel (%p580) target = $region52
      $region51: #{tpu_custom_call.1} parent=5 // pred_region
        %s583 = ssub.s32 %s17, 2
        // Predicated region
        $region53: #{tpu_custom_call.1} parent=51 // pred_check
          %p584 = pneg %p135
        $region54: #{tpu_custom_call.1} parent=51 // pred_check_branch
          %586 = sbr.rel (%p584) target = $region56
        $region55: #{tpu_custom_call.1} parent=51 // pred_region
          %s587 = sand.u32 %s120, 1
          %s588 = scalar_lea.sflag [#allocation8], %s587
          %s589 = sand.u32 %s120, 1
          %s590 = smul.addr %s589, 4
          %s591 = scalar_lea.vmem [#allocation11], %s590
          %593 = dma.done %s588, 64
        $region56: #{tpu_custom_call.1} parent=51 // pred_fallthru
          _
      $region52: #{tpu_custom_call.1} parent=5 // pred_fallthru
        _
    $region6: #{tpu_custom_call.1} parent=1 // loop_footer
      %s21 = sadd.s32 1, %s17
    $region7: #{tpu_custom_call.1} parent=1 // loop_footer_branch
      %16 = sbr.rel target = $region3
    $region8: #{tpu_custom_call.1} parent=1 // loop_exit
      _
    %594 = vsyncpa [#allocation7], 1
    %s595 = scalar_lea.sflag [#allocation7], 1
    %596 = vsyncpa %s595, 1
    %597 = vsyncpa [#allocation10], 1
    %s598 = scalar_lea.sflag [#allocation10], 1
    %599 = vsyncpa %s598, 1
    %600 = vsyncpa [#allocation8], 1
    %s601 = scalar_lea.sflag [#allocation8], 1
    %602 = vsyncpa %s601, 1

</llo_original>
